<compile_context>
chip_gen: v7x
topology: tpu7x:2x2x1
jax: 0.10.0
libtpu: 0.0.40
codegen_flags: <defaults>
</compile_context>

<pallas_src>
import math

import jax
import jax.numpy as jnp
from jax import lax
from jax.experimental import pallas as pl
from jax.experimental.pallas import tpu as pltpu


# ----------------------------------------------------------------------------- #
# Fused kernel: ConvEncoder (conv + BN + Leaky spike) + GRU gating + LIF scan
# ----------------------------------------------------------------------------- #
def make_fused_kernel(B, T, K, num_steps, lif_beta, eps=1e-5):
    def kernel(xp_ref, convw_ref, convb_ref, gamma_ref, bn_beta_ref,
               wih_ref, bih_ref, bhh_ref, spk_ref):
        Hp = spk_ref.shape[-1]

        # ---- Conv2d(1->H, kernel (1,K)) along T: K shifted VPU FMAs (no im2col) ----
        enc = xp_ref[:, 0:T, :] * convw_ref[0:1, :]            # (B,T,1)*(1,Hp) -> (B,T,Hp)
        for k in range(1, K):
            enc = enc + xp_ref[:, k:k + T, :] * convw_ref[k:k + 1, :]
        enc = enc + convb_ref[...]
        enc = enc.reshape(B * T, Hp)                           # rows = (b, t), b-major

        # ---- BatchNorm2d, train-mode batch stats over all B*T rows, one pass ------
        inv_n = 1.0 / float(B * T)
        mean = jnp.sum(enc, axis=0, keepdims=True) * inv_n
        var = jnp.sum(enc * enc, axis=0, keepdims=True) * inv_n - mean * mean
        bn = (enc - mean) * (lax.rsqrt(var + eps) * gamma_ref[...]) + bn_beta_ref[...]

        # ---- encoder snn.Leaky first call (mem0 == 0): spk = heaviside(bn - 1), '>' -
        spk_enc = (bn > 1.0).astype(jnp.float32)

        # ---- GRUCell static branch (h0 == 0): 3 bf16 MXU matmuls + hard gates ------
        spk_bf16 = spk_enc.astype(jnp.bfloat16)                # exact: values are {0,1}

        def y_gate(g):
            return jnp.dot(spk_bf16, wih_ref[g],
                           preferred_element_type=jnp.float32) + bih_ref[g]

        r = (y_gate(0) + bhh_ref[0] >= 0.0).astype(jnp.float32)
        z = (y_gate(1) + bhh_ref[1] >= 0.0).astype(jnp.float32)
        n = (y_gate(2) + r * bhh_ref[2] >= 0.0).astype(jnp.float32)
        cur = ((1.0 - z) * n).reshape(B, T, Hp)                # z*h_prev vanishes (h0 == 0)

        # ---- LIF scan: mem carried across all T steps; record only the last step ---
        # TODO(synk): for large T*num_steps switch these static unrolls to lax.fori_loop
        #             with cur staged in a (T, B, Hp) VMEM scratch.
        mem = jnp.zeros((B, 1, Hp), jnp.float32)
        for i in range(T - 1):                                 # spikes discarded here
            cur_i = cur[:, i:i + 1, :]                         # (B,1,Hp)
            for _ in range(num_steps):
                reset = (mem > 1.0).astype(jnp.float32)
                mem = lif_beta * mem + cur_i - reset
        cur_last = cur[:, T - 1:T, :]
        spk_steps = []
        for _ in range(num_steps):
            reset = (mem > 1.0).astype(jnp.float32)
            mem = lif_beta * mem + cur_last - reset
            spk_steps.append((mem > 1.0).astype(jnp.float32))
        # single lane-dense slab store of the whole spike record
        spk_ref[...] = jnp.stack(spk_steps, axis=0)            # (NS, B, 1, Hp)

    return kernel


# ----------------------------------------------------------------------------- #
# Wrapper
# ----------------------------------------------------------------------------- #
def _full_spec(shape):
    nd = len(shape)
    return pl.BlockSpec(shape, lambda i, _n=nd: (0,) * _n)


def tssnngru_forward(x, params, num_steps, lif_beta=0.99):
    """x: (B, T, 1) float32. Returns (spks.transpose(1,2) -> (B, NS, H), spks[:,:,-1] -> (B, H))."""
    B, T, C = x.shape
    assert C == 1, "see layout note: forward only type-checks for C == 1"
    K, H = params["conv_w"].shape
    Hp = ((H + 127) // 128) * 128          # lane-dense channel padding (multiple of 128)
    dH = Hp - H
    pad = K // 2
    Tp = T + 2 * pad

    # zero-pad the channel dim; padded channels emit spk == 0 / cur == 0 and are sliced off.
    conv_w = jnp.pad(params["conv_w"], ((0, 0), (0, dH)))
    conv_b = jnp.pad(params["conv_b"], ((0, 0), (0, dH)))
    gamma = jnp.pad(params["bn_gamma"], ((0, 0), (0, dH)), constant_values=1.0)
    bn_beta = jnp.pad(params["bn_beta"], ((0, 0), (0, dH)))
    w_ih = jnp.pad(params["w_ih"], ((0, 0), (0, dH), (0, dH))).astype(jnp.bfloat16)
    b_ih = jnp.pad(params["b_ih"], ((0, 0), (0, 0), (0, dH)))
    b_hh = jnp.pad(params["b_hh"], ((0, 0), (0, 0), (0, dH)))

    # conv glue: zero-pad the time axis (the conv's sliding axis); no im2col materialized.
    xp = jnp.pad(x, ((0, 0), (pad, pad), (0, 0)))              # (B, Tp, 1)

    spk4 = pl.pallas_call(
        make_fused_kernel(B, T, K, num_steps, lif_beta),
        out_shape=jax.ShapeDtypeStruct((num_steps, B, 1, Hp), jnp.float32),
        grid=(1,),
        in_specs=[_full_spec((B, Tp, 1)),
                  _full_spec((K, Hp)),
                  _full_spec((1, Hp)),
                  _full_spec((1, Hp)),
                  _full_spec((1, Hp)),
                  _full_spec((3, Hp, Hp)),
                  _full_spec((3, 1, Hp)),
                  _full_spec((3, 1, Hp))],
        out_specs=_full_spec((num_steps, B, 1, Hp)),
        compiler_params=pltpu.CompilerParams(
            dimension_semantics=("arbitrary",)),
    )(xp, conv_w, conv_b, gamma, bn_beta, w_ih, b_ih, b_hh)

    # drop lane padding + tiny output-layout fixup (NS*B*H elements only)
    spks = jnp.transpose(spk4[:, :, 0, :H], (1, 0, 2))         # (B, NS, H)
    return spks, spks[:, -1, :]


# ----------------------------------------------------------------------------- #
# Deterministic parameter construction (PyTorch default init ranges)
# ----------------------------------------------------------------------------- #
def make_params(key, hidden, kernel_size=3):
    k1, k2, k3, k4, k5 = jax.random.split(key, 5)
    H, K = hidden, kernel_size
    cb = 1.0 / math.sqrt(1 * 1 * K)        # Conv2d fan_in = in_ch * kh * kw
    lb = 1.0 / math.sqrt(H)                # Linear fan_in = hidden
    return {
        # conv weight (H,1,1,K) stored transposed as (K, H)
        "conv_w": jax.random.uniform(k1, (K, H), jnp.float32, -cb, cb),
        "conv_b": jax.random.uniform(k2, (1, H), jnp.float32, -cb, cb),
        "bn_gamma": jnp.ones((1, H), jnp.float32),
        "bn_beta": jnp.zeros((1, H), jnp.float32),
        # linear_ih.weight (3H, H) stored per-gate, transposed: w_ih[g] = W[gH:(g+1)H, :].T
        "w_ih": jax.random.uniform(k3, (3, H, H), jnp.float32, -lb, lb),
        "b_ih": jax.random.uniform(k4, (3, 1, H), jnp.float32, -lb, lb),
        # linear_hh weight only ever multiplies h0 == 0; only its bias reaches the output.
        "b_hh": jax.random.uniform(k5, (3, 1, H), jnp.float32, -lb, lb),
    }


if __name__ == "__main__":
    B, T, C = 2, 8, 1
    HIDDEN, NUM_STEPS = 32, 4              # layers=1 (default): single GRUCell w/ output_mems

    root = jax.random.PRNGKey(0)
    kx, kp = jax.random.split(root)
    x = jax.random.normal(kx, (B, T, C), dtype=jnp.float32)
    params = make_params(kp, HIDDEN)

    out_seq, out_last = jax.jit(
        lambda xx: tssnngru_forward(xx, params, NUM_STEPS))(x)
    jax.block_until_ready((out_seq, out_last))

    assert out_seq.shape == (B, NUM_STEPS, HIDDEN)
    assert out_last.shape == (B, HIDDEN)
    print("KERNEL_OK")
</pallas_src>

<mosaic_0001>
module attributes {stable_mosaic.version = 11 : i64} {
  func.func @kernel(%arg0: i32, %arg1: memref<2x10x1xf32, #tpu.memory_space<vmem>>, %arg2: memref<3x128xf32, #tpu.memory_space<vmem>>, %arg3: memref<1x128xf32, #tpu.memory_space<vmem>>, %arg4: memref<1x128xf32, #tpu.memory_space<vmem>>, %arg5: memref<1x128xf32, #tpu.memory_space<vmem>>, %arg6: memref<3x128x128xbf16, #tpu.memory_space<vmem>>, %arg7: memref<3x1x128xf32, #tpu.memory_space<vmem>>, %arg8: memref<3x1x128xf32, #tpu.memory_space<vmem>>, %arg9: memref<4x2x1x128xf32, #tpu.memory_space<vmem>>) attributes {dimension_semantics = [#tpu.dimension_semantics<arbitrary>], iteration_bounds = array<i64: 1>, scalar_prefetch = 0 : i64, scratch_operands = 0 : i64, tpu.core_type = #tpu.core_type<tc>, window_params = [{pipeline_mode = #tpu.pipeline_mode<synchronous>, transform_indices = @transform_0, window_bounds = array<i64: 2, 10, 1>}, {pipeline_mode = #tpu.pipeline_mode<synchronous>, transform_indices = @transform_1, window_bounds = array<i64: 3, 128>}, {pipeline_mode = #tpu.pipeline_mode<synchronous>, transform_indices = @transform_2, window_bounds = array<i64: 1, 128>}, {pipeline_mode = #tpu.pipeline_mode<synchronous>, transform_indices = @transform_3, window_bounds = array<i64: 1, 128>}, {pipeline_mode = #tpu.pipeline_mode<synchronous>, transform_indices = @transform_4, window_bounds = array<i64: 1, 128>}, {pipeline_mode = #tpu.pipeline_mode<synchronous>, transform_indices = @transform_5, window_bounds = array<i64: 3, 128, 128>}, {pipeline_mode = #tpu.pipeline_mode<synchronous>, transform_indices = @transform_6, window_bounds = array<i64: 3, 1, 128>}, {pipeline_mode = #tpu.pipeline_mode<synchronous>, transform_indices = @transform_7, window_bounds = array<i64: 3, 1, 128>}, {pipeline_mode = #tpu.pipeline_mode<synchronous>, transform_indices = @transform_8, window_bounds = array<i64: 4, 2, 1, 128>}]} {
    %c0 = arith.constant 0 : index
    %c0_0 = arith.constant 0 : index
    %c0_1 = arith.constant 0 : index
    %0 = vector.load %arg1[%c0, %c0_0, %c0_1] : memref<2x10x1xf32, #tpu.memory_space<vmem>>, vector<2x8x1xf32>
    %c0_2 = arith.constant 0 : index
    %c0_3 = arith.constant 0 : index
    %1 = vector.load %arg2[%c0_2, %c0_3] : memref<3x128xf32, #tpu.memory_space<vmem>>, vector<1x128xf32>
    %2 = vector.shape_cast %1 : vector<1x128xf32> to vector<1x1x128xf32>
    %3 = vector.broadcast %0 : vector<2x8x1xf32> to vector<2x8x128xf32>
    %4 = vector.broadcast %2 : vector<1x1x128xf32> to vector<2x8x128xf32>
    %5 = arith.mulf %3, %4 : vector<2x8x128xf32>
    %c0_4 = arith.constant 0 : index
    %c1 = arith.constant 1 : index
    %c0_5 = arith.constant 0 : index
    %6 = vector.load %arg1[%c0_4, %c1, %c0_5] : memref<2x10x1xf32, #tpu.memory_space<vmem>>, vector<2x8x1xf32>
    %c1_6 = arith.constant 1 : index
    %c0_7 = arith.constant 0 : index
    %7 = vector.load %arg2[%c1_6, %c0_7] : memref<3x128xf32, #tpu.memory_space<vmem>>, vector<1x128xf32>
    %8 = vector.shape_cast %7 : vector<1x128xf32> to vector<1x1x128xf32>
    %9 = vector.broadcast %6 : vector<2x8x1xf32> to vector<2x8x128xf32>
    %10 = vector.broadcast %8 : vector<1x1x128xf32> to vector<2x8x128xf32>
    %11 = arith.mulf %9, %10 : vector<2x8x128xf32>
    %12 = arith.addf %5, %11 : vector<2x8x128xf32>
    %c0_8 = arith.constant 0 : index
    %c2 = arith.constant 2 : index
    %c0_9 = arith.constant 0 : index
    %13 = vector.load %arg1[%c0_8, %c2, %c0_9] : memref<2x10x1xf32, #tpu.memory_space<vmem>>, vector<2x8x1xf32>
    %c2_10 = arith.constant 2 : index
    %c0_11 = arith.constant 0 : index
    %14 = vector.load %arg2[%c2_10, %c0_11] : memref<3x128xf32, #tpu.memory_space<vmem>>, vector<1x128xf32>
    %15 = vector.shape_cast %14 : vector<1x128xf32> to vector<1x1x128xf32>
    %16 = vector.broadcast %13 : vector<2x8x1xf32> to vector<2x8x128xf32>
    %17 = vector.broadcast %15 : vector<1x1x128xf32> to vector<2x8x128xf32>
    %18 = arith.mulf %16, %17 : vector<2x8x128xf32>
    %19 = arith.addf %12, %18 : vector<2x8x128xf32>
    %c0_12 = arith.constant 0 : index
    %c0_13 = arith.constant 0 : index
    %20 = vector.load %arg3[%c0_12, %c0_13] : memref<1x128xf32, #tpu.memory_space<vmem>>, vector<1x128xf32>
    %21 = vector.shape_cast %20 : vector<1x128xf32> to vector<1x1x128xf32>
    %22 = vector.broadcast %21 : vector<1x1x128xf32> to vector<2x8x128xf32>
    %23 = arith.addf %19, %22 : vector<2x8x128xf32>
    %24 = vector.shape_cast %23 : vector<2x8x128xf32> to vector<16x128xf32>
    %cst = arith.constant dense<0.000000e+00> : vector<128xf32>
    %25 = vector.multi_reduction <add>, %24, %cst [0] : vector<16x128xf32> to vector<128xf32>
    %26 = vector.shape_cast %25 : vector<128xf32> to vector<1x128xf32>
    %cst_14 = arith.constant 6.250000e-02 : f32
    %27 = vector.broadcast %cst_14 : f32 to vector<1x128xf32>
    %28 = arith.mulf %26, %27 : vector<1x128xf32>
    %29 = arith.mulf %24, %24 : vector<16x128xf32>
    %cst_15 = arith.constant dense<0.000000e+00> : vector<128xf32>
    %30 = vector.multi_reduction <add>, %29, %cst_15 [0] : vector<16x128xf32> to vector<128xf32>
    %31 = vector.shape_cast %30 : vector<128xf32> to vector<1x128xf32>
    %cst_16 = arith.constant 6.250000e-02 : f32
    %32 = vector.broadcast %cst_16 : f32 to vector<1x128xf32>
    %33 = arith.mulf %31, %32 : vector<1x128xf32>
    %34 = arith.mulf %28, %28 : vector<1x128xf32>
    %35 = arith.subf %33, %34 : vector<1x128xf32>
    %36 = vector.broadcast %28 : vector<1x128xf32> to vector<16x128xf32>
    %37 = arith.subf %24, %36 : vector<16x128xf32>
    %cst_17 = arith.constant 9.99999974E-6 : f32
    %38 = vector.broadcast %cst_17 : f32 to vector<1x128xf32>
    %39 = arith.addf %35, %38 : vector<1x128xf32>
    %40 = math.rsqrt %39 : vector<1x128xf32>
    %c0_18 = arith.constant 0 : index
    %c0_19 = arith.constant 0 : index
    %41 = vector.load %arg4[%c0_18, %c0_19] : memref<1x128xf32, #tpu.memory_space<vmem>>, vector<1x128xf32>
    %42 = arith.mulf %40, %41 : vector<1x128xf32>
    %43 = vector.broadcast %42 : vector<1x128xf32> to vector<16x128xf32>
    %44 = arith.mulf %37, %43 : vector<16x128xf32>
    %c0_20 = arith.constant 0 : index
    %c0_21 = arith.constant 0 : index
    %45 = vector.load %arg5[%c0_20, %c0_21] : memref<1x128xf32, #tpu.memory_space<vmem>>, vector<1x128xf32>
    %46 = vector.broadcast %45 : vector<1x128xf32> to vector<16x128xf32>
    %47 = arith.addf %44, %46 : vector<16x128xf32>
    %cst_22 = arith.constant 1.000000e+00 : f32
    %48 = vector.broadcast %cst_22 : f32 to vector<16x128xf32>
    %49 = arith.cmpf ogt, %47, %48 : vector<16x128xf32>
    %50 = arith.extui %49 : vector<16x128xi1> to vector<16x128xi32>
    %51 = arith.sitofp %50 : vector<16x128xi32> to vector<16x128xf32>
    %52 = arith.truncf %51 : vector<16x128xf32> to vector<16x128xbf16>
    %c0_23 = arith.constant 0 : index
    %c0_24 = arith.constant 0 : index
    %c0_25 = arith.constant 0 : index
    %53 = vector.load %arg6[%c0_23, %c0_24, %c0_25] : memref<3x128x128xbf16, #tpu.memory_space<vmem>>, vector<1x128x128xbf16>
    %54 = vector.shape_cast %53 : vector<1x128x128xbf16> to vector<128x128xbf16>
    %cst_26 = arith.constant dense<0.000000e+00> : vector<16x128xf32>
    %55 = tpu.matmul %52, %54, %cst_26 {dimension_numbers = #tpu.dot_dimension_numbers<[1], [0], [0], [1], [0, 0, 1, 1], [], []>} : vector<16x128xbf16>, vector<128x128xbf16>, vector<16x128xf32> -> vector<16x128xf32>
    %c0_27 = arith.constant 0 : index
    %c0_28 = arith.constant 0 : index
    %c0_29 = arith.constant 0 : index
    %56 = vector.load %arg7[%c0_27, %c0_28, %c0_29] : memref<3x1x128xf32, #tpu.memory_space<vmem>>, vector<1x1x128xf32>
    %57 = vector.shape_cast %56 : vector<1x1x128xf32> to vector<1x128xf32>
    %58 = vector.broadcast %57 : vector<1x128xf32> to vector<16x128xf32>
    %59 = arith.addf %55, %58 : vector<16x128xf32>
    %c0_30 = arith.constant 0 : index
    %c0_31 = arith.constant 0 : index
    %c0_32 = arith.constant 0 : index
    %60 = vector.load %arg8[%c0_30, %c0_31, %c0_32] : memref<3x1x128xf32, #tpu.memory_space<vmem>>, vector<1x1x128xf32>
    %61 = vector.shape_cast %60 : vector<1x1x128xf32> to vector<1x128xf32>
    %62 = vector.broadcast %61 : vector<1x128xf32> to vector<16x128xf32>
    %63 = arith.addf %59, %62 : vector<16x128xf32>
    %cst_33 = arith.constant 0.000000e+00 : f32
    %64 = vector.broadcast %cst_33 : f32 to vector<16x128xf32>
    %65 = arith.cmpf oge, %63, %64 : vector<16x128xf32>
    %66 = arith.extui %65 : vector<16x128xi1> to vector<16x128xi32>
    %67 = arith.sitofp %66 : vector<16x128xi32> to vector<16x128xf32>
    %c1_34 = arith.constant 1 : index
    %c0_35 = arith.constant 0 : index
    %c0_36 = arith.constant 0 : index
    %68 = vector.load %arg6[%c1_34, %c0_35, %c0_36] : memref<3x128x128xbf16, #tpu.memory_space<vmem>>, vector<1x128x128xbf16>
    %69 = vector.shape_cast %68 : vector<1x128x128xbf16> to vector<128x128xbf16>
    %cst_37 = arith.constant dense<0.000000e+00> : vector<16x128xf32>
    %70 = tpu.matmul %52, %69, %cst_37 {dimension_numbers = #tpu.dot_dimension_numbers<[1], [0], [0], [1], [0, 0, 1, 1], [], []>} : vector<16x128xbf16>, vector<128x128xbf16>, vector<16x128xf32> -> vector<16x128xf32>
    %c1_38 = arith.constant 1 : index
    %c0_39 = arith.constant 0 : index
    %c0_40 = arith.constant 0 : index
    %71 = vector.load %arg7[%c1_38, %c0_39, %c0_40] : memref<3x1x128xf32, #tpu.memory_space<vmem>>, vector<1x1x128xf32>
    %72 = vector.shape_cast %71 : vector<1x1x128xf32> to vector<1x128xf32>
    %73 = vector.broadcast %72 : vector<1x128xf32> to vector<16x128xf32>
    %74 = arith.addf %70, %73 : vector<16x128xf32>
    %c1_41 = arith.constant 1 : index
    %c0_42 = arith.constant 0 : index
    %c0_43 = arith.constant 0 : index
    %75 = vector.load %arg8[%c1_41, %c0_42, %c0_43] : memref<3x1x128xf32, #tpu.memory_space<vmem>>, vector<1x1x128xf32>
    %76 = vector.shape_cast %75 : vector<1x1x128xf32> to vector<1x128xf32>
    %77 = vector.broadcast %76 : vector<1x128xf32> to vector<16x128xf32>
    %78 = arith.addf %74, %77 : vector<16x128xf32>
    %cst_44 = arith.constant 0.000000e+00 : f32
    %79 = vector.broadcast %cst_44 : f32 to vector<16x128xf32>
    %80 = arith.cmpf oge, %78, %79 : vector<16x128xf32>
    %81 = arith.extui %80 : vector<16x128xi1> to vector<16x128xi32>
    %82 = arith.sitofp %81 : vector<16x128xi32> to vector<16x128xf32>
    %c2_45 = arith.constant 2 : index
    %c0_46 = arith.constant 0 : index
    %c0_47 = arith.constant 0 : index
    %83 = vector.load %arg6[%c2_45, %c0_46, %c0_47] : memref<3x128x128xbf16, #tpu.memory_space<vmem>>, vector<1x128x128xbf16>
    %84 = vector.shape_cast %83 : vector<1x128x128xbf16> to vector<128x128xbf16>
    %cst_48 = arith.constant dense<0.000000e+00> : vector<16x128xf32>
    %85 = tpu.matmul %52, %84, %cst_48 {dimension_numbers = #tpu.dot_dimension_numbers<[1], [0], [0], [1], [0, 0, 1, 1], [], []>} : vector<16x128xbf16>, vector<128x128xbf16>, vector<16x128xf32> -> vector<16x128xf32>
    %c2_49 = arith.constant 2 : index
    %c0_50 = arith.constant 0 : index
    %c0_51 = arith.constant 0 : index
    %86 = vector.load %arg7[%c2_49, %c0_50, %c0_51] : memref<3x1x128xf32, #tpu.memory_space<vmem>>, vector<1x1x128xf32>
    %87 = vector.shape_cast %86 : vector<1x1x128xf32> to vector<1x128xf32>
    %88 = vector.broadcast %87 : vector<1x128xf32> to vector<16x128xf32>
    %89 = arith.addf %85, %88 : vector<16x128xf32>
    %c2_52 = arith.constant 2 : index
    %c0_53 = arith.constant 0 : index
    %c0_54 = arith.constant 0 : index
    %90 = vector.load %arg8[%c2_52, %c0_53, %c0_54] : memref<3x1x128xf32, #tpu.memory_space<vmem>>, vector<1x1x128xf32>
    %91 = vector.shape_cast %90 : vector<1x1x128xf32> to vector<1x128xf32>
    %92 = vector.broadcast %91 : vector<1x128xf32> to vector<16x128xf32>
    %93 = arith.mulf %67, %92 : vector<16x128xf32>
    %94 = arith.addf %89, %93 : vector<16x128xf32>
    %cst_55 = arith.constant 0.000000e+00 : f32
    %95 = vector.broadcast %cst_55 : f32 to vector<16x128xf32>
    %96 = arith.cmpf oge, %94, %95 : vector<16x128xf32>
    %97 = arith.extui %96 : vector<16x128xi1> to vector<16x128xi32>
    %98 = arith.sitofp %97 : vector<16x128xi32> to vector<16x128xf32>
    %cst_56 = arith.constant 1.000000e+00 : f32
    %99 = vector.broadcast %cst_56 : f32 to vector<16x128xf32>
    %100 = arith.subf %99, %82 : vector<16x128xf32>
    %101 = arith.mulf %100, %98 : vector<16x128xf32>
    %102 = vector.shape_cast %101 : vector<16x128xf32> to vector<2x8x128xf32>
    %cst_57 = arith.constant 0.000000e+00 : f32
    %103 = vector.broadcast %cst_57 : f32 to vector<2x1x128xf32>
    %104 = vector.extract_strided_slice %102 {offsets = [0, 0, 0], sizes = [2, 1, 128], strides = [1, 1, 1]} : vector<2x8x128xf32> to vector<2x1x128xf32>
    %cst_58 = arith.constant 1.000000e+00 : f32
    %105 = vector.broadcast %cst_58 : f32 to vector<2x1x128xf32>
    %106 = arith.cmpf ogt, %103, %105 : vector<2x1x128xf32>
    %107 = arith.extui %106 : vector<2x1x128xi1> to vector<2x1x128xi32>
    %108 = arith.sitofp %107 : vector<2x1x128xi32> to vector<2x1x128xf32>
    %cst_59 = arith.constant 9.900000e-01 : f32
    %109 = vector.broadcast %cst_59 : f32 to vector<2x1x128xf32>
    %110 = arith.mulf %109, %103 : vector<2x1x128xf32>
    %111 = arith.addf %110, %104 : vector<2x1x128xf32>
    %112 = arith.subf %111, %108 : vector<2x1x128xf32>
    %cst_60 = arith.constant 1.000000e+00 : f32
    %113 = vector.broadcast %cst_60 : f32 to vector<2x1x128xf32>
    %114 = arith.cmpf ogt, %112, %113 : vector<2x1x128xf32>
    %115 = arith.extui %114 : vector<2x1x128xi1> to vector<2x1x128xi32>
    %116 = arith.sitofp %115 : vector<2x1x128xi32> to vector<2x1x128xf32>
    %cst_61 = arith.constant 9.900000e-01 : f32
    %117 = vector.broadcast %cst_61 : f32 to vector<2x1x128xf32>
    %118 = arith.mulf %117, %112 : vector<2x1x128xf32>
    %119 = arith.addf %118, %104 : vector<2x1x128xf32>
    %120 = arith.subf %119, %116 : vector<2x1x128xf32>
    %cst_62 = arith.constant 1.000000e+00 : f32
    %121 = vector.broadcast %cst_62 : f32 to vector<2x1x128xf32>
    %122 = arith.cmpf ogt, %120, %121 : vector<2x1x128xf32>
    %123 = arith.extui %122 : vector<2x1x128xi1> to vector<2x1x128xi32>
    %124 = arith.sitofp %123 : vector<2x1x128xi32> to vector<2x1x128xf32>
    %cst_63 = arith.constant 9.900000e-01 : f32
    %125 = vector.broadcast %cst_63 : f32 to vector<2x1x128xf32>
    %126 = arith.mulf %125, %120 : vector<2x1x128xf32>
    %127 = arith.addf %126, %104 : vector<2x1x128xf32>
    %128 = arith.subf %127, %124 : vector<2x1x128xf32>
    %cst_64 = arith.constant 1.000000e+00 : f32
    %129 = vector.broadcast %cst_64 : f32 to vector<2x1x128xf32>
    %130 = arith.cmpf ogt, %128, %129 : vector<2x1x128xf32>
    %131 = arith.extui %130 : vector<2x1x128xi1> to vector<2x1x128xi32>
    %132 = arith.sitofp %131 : vector<2x1x128xi32> to vector<2x1x128xf32>
    %cst_65 = arith.constant 9.900000e-01 : f32
    %133 = vector.broadcast %cst_65 : f32 to vector<2x1x128xf32>
    %134 = arith.mulf %133, %128 : vector<2x1x128xf32>
    %135 = arith.addf %134, %104 : vector<2x1x128xf32>
    %136 = arith.subf %135, %132 : vector<2x1x128xf32>
    %137 = vector.extract_strided_slice %102 {offsets = [0, 1, 0], sizes = [2, 1, 128], strides = [1, 1, 1]} : vector<2x8x128xf32> to vector<2x1x128xf32>
    %cst_66 = arith.constant 1.000000e+00 : f32
    %138 = vector.broadcast %cst_66 : f32 to vector<2x1x128xf32>
    %139 = arith.cmpf ogt, %136, %138 : vector<2x1x128xf32>
    %140 = arith.extui %139 : vector<2x1x128xi1> to vector<2x1x128xi32>
    %141 = arith.sitofp %140 : vector<2x1x128xi32> to vector<2x1x128xf32>
    %cst_67 = arith.constant 9.900000e-01 : f32
    %142 = vector.broadcast %cst_67 : f32 to vector<2x1x128xf32>
    %143 = arith.mulf %142, %136 : vector<2x1x128xf32>
    %144 = arith.addf %143, %137 : vector<2x1x128xf32>
    %145 = arith.subf %144, %141 : vector<2x1x128xf32>
    %cst_68 = arith.constant 1.000000e+00 : f32
    %146 = vector.broadcast %cst_68 : f32 to vector<2x1x128xf32>
    %147 = arith.cmpf ogt, %145, %146 : vector<2x1x128xf32>
    %148 = arith.extui %147 : vector<2x1x128xi1> to vector<2x1x128xi32>
    %149 = arith.sitofp %148 : vector<2x1x128xi32> to vector<2x1x128xf32>
    %cst_69 = arith.constant 9.900000e-01 : f32
    %150 = vector.broadcast %cst_69 : f32 to vector<2x1x128xf32>
    %151 = arith.mulf %150, %145 : vector<2x1x128xf32>
    %152 = arith.addf %151, %137 : vector<2x1x128xf32>
    %153 = arith.subf %152, %149 : vector<2x1x128xf32>
    %cst_70 = arith.constant 1.000000e+00 : f32
    %154 = vector.broadcast %cst_70 : f32 to vector<2x1x128xf32>
    %155 = arith.cmpf ogt, %153, %154 : vector<2x1x128xf32>
    %156 = arith.extui %155 : vector<2x1x128xi1> to vector<2x1x128xi32>
    %157 = arith.sitofp %156 : vector<2x1x128xi32> to vector<2x1x128xf32>
    %cst_71 = arith.constant 9.900000e-01 : f32
    %158 = vector.broadcast %cst_71 : f32 to vector<2x1x128xf32>
    %159 = arith.mulf %158, %153 : vector<2x1x128xf32>
    %160 = arith.addf %159, %137 : vector<2x1x128xf32>
    %161 = arith.subf %160, %157 : vector<2x1x128xf32>
    %cst_72 = arith.constant 1.000000e+00 : f32
    %162 = vector.broadcast %cst_72 : f32 to vector<2x1x128xf32>
    %163 = arith.cmpf ogt, %161, %162 : vector<2x1x128xf32>
    %164 = arith.extui %163 : vector<2x1x128xi1> to vector<2x1x128xi32>
    %165 = arith.sitofp %164 : vector<2x1x128xi32> to vector<2x1x128xf32>
    %cst_73 = arith.constant 9.900000e-01 : f32
    %166 = vector.broadcast %cst_73 : f32 to vector<2x1x128xf32>
    %167 = arith.mulf %166, %161 : vector<2x1x128xf32>
    %168 = arith.addf %167, %137 : vector<2x1x128xf32>
    %169 = arith.subf %168, %165 : vector<2x1x128xf32>
    %170 = vector.extract_strided_slice %102 {offsets = [0, 2, 0], sizes = [2, 1, 128], strides = [1, 1, 1]} : vector<2x8x128xf32> to vector<2x1x128xf32>
    %cst_74 = arith.constant 1.000000e+00 : f32
    %171 = vector.broadcast %cst_74 : f32 to vector<2x1x128xf32>
    %172 = arith.cmpf ogt, %169, %171 : vector<2x1x128xf32>
    %173 = arith.extui %172 : vector<2x1x128xi1> to vector<2x1x128xi32>
    %174 = arith.sitofp %173 : vector<2x1x128xi32> to vector<2x1x128xf32>
    %cst_75 = arith.constant 9.900000e-01 : f32
    %175 = vector.broadcast %cst_75 : f32 to vector<2x1x128xf32>
    %176 = arith.mulf %175, %169 : vector<2x1x128xf32>
    %177 = arith.addf %176, %170 : vector<2x1x128xf32>
    %178 = arith.subf %177, %174 : vector<2x1x128xf32>
    %cst_76 = arith.constant 1.000000e+00 : f32
    %179 = vector.broadcast %cst_76 : f32 to vector<2x1x128xf32>
    %180 = arith.cmpf ogt, %178, %179 : vector<2x1x128xf32>
    %181 = arith.extui %180 : vector<2x1x128xi1> to vector<2x1x128xi32>
    %182 = arith.sitofp %181 : vector<2x1x128xi32> to vector<2x1x128xf32>
    %cst_77 = arith.constant 9.900000e-01 : f32
    %183 = vector.broadcast %cst_77 : f32 to vector<2x1x128xf32>
    %184 = arith.mulf %183, %178 : vector<2x1x128xf32>
    %185 = arith.addf %184, %170 : vector<2x1x128xf32>
    %186 = arith.subf %185, %182 : vector<2x1x128xf32>
    %cst_78 = arith.constant 1.000000e+00 : f32
    %187 = vector.broadcast %cst_78 : f32 to vector<2x1x128xf32>
    %188 = arith.cmpf ogt, %186, %187 : vector<2x1x128xf32>
    %189 = arith.extui %188 : vector<2x1x128xi1> to vector<2x1x128xi32>
    %190 = arith.sitofp %189 : vector<2x1x128xi32> to vector<2x1x128xf32>
    %cst_79 = arith.constant 9.900000e-01 : f32
    %191 = vector.broadcast %cst_79 : f32 to vector<2x1x128xf32>
    %192 = arith.mulf %191, %186 : vector<2x1x128xf32>
    %193 = arith.addf %192, %170 : vector<2x1x128xf32>
    %194 = arith.subf %193, %190 : vector<2x1x128xf32>
    %cst_80 = arith.constant 1.000000e+00 : f32
    %195 = vector.broadcast %cst_80 : f32 to vector<2x1x128xf32>
    %196 = arith.cmpf ogt, %194, %195 : vector<2x1x128xf32>
    %197 = arith.extui %196 : vector<2x1x128xi1> to vector<2x1x128xi32>
    %198 = arith.sitofp %197 : vector<2x1x128xi32> to vector<2x1x128xf32>
    %cst_81 = arith.constant 9.900000e-01 : f32
    %199 = vector.broadcast %cst_81 : f32 to vector<2x1x128xf32>
    %200 = arith.mulf %199, %194 : vector<2x1x128xf32>
    %201 = arith.addf %200, %170 : vector<2x1x128xf32>
    %202 = arith.subf %201, %198 : vector<2x1x128xf32>
    %203 = vector.extract_strided_slice %102 {offsets = [0, 3, 0], sizes = [2, 1, 128], strides = [1, 1, 1]} : vector<2x8x128xf32> to vector<2x1x128xf32>
    %cst_82 = arith.constant 1.000000e+00 : f32
    %204 = vector.broadcast %cst_82 : f32 to vector<2x1x128xf32>
    %205 = arith.cmpf ogt, %202, %204 : vector<2x1x128xf32>
    %206 = arith.extui %205 : vector<2x1x128xi1> to vector<2x1x128xi32>
    %207 = arith.sitofp %206 : vector<2x1x128xi32> to vector<2x1x128xf32>
    %cst_83 = arith.constant 9.900000e-01 : f32
    %208 = vector.broadcast %cst_83 : f32 to vector<2x1x128xf32>
    %209 = arith.mulf %208, %202 : vector<2x1x128xf32>
    %210 = arith.addf %209, %203 : vector<2x1x128xf32>
    %211 = arith.subf %210, %207 : vector<2x1x128xf32>
    %cst_84 = arith.constant 1.000000e+00 : f32
    %212 = vector.broadcast %cst_84 : f32 to vector<2x1x128xf32>
    %213 = arith.cmpf ogt, %211, %212 : vector<2x1x128xf32>
    %214 = arith.extui %213 : vector<2x1x128xi1> to vector<2x1x128xi32>
    %215 = arith.sitofp %214 : vector<2x1x128xi32> to vector<2x1x128xf32>
    %cst_85 = arith.constant 9.900000e-01 : f32
    %216 = vector.broadcast %cst_85 : f32 to vector<2x1x128xf32>
    %217 = arith.mulf %216, %211 : vector<2x1x128xf32>
    %218 = arith.addf %217, %203 : vector<2x1x128xf32>
    %219 = arith.subf %218, %215 : vector<2x1x128xf32>
    %cst_86 = arith.constant 1.000000e+00 : f32
    %220 = vector.broadcast %cst_86 : f32 to vector<2x1x128xf32>
    %221 = arith.cmpf ogt, %219, %220 : vector<2x1x128xf32>
    %222 = arith.extui %221 : vector<2x1x128xi1> to vector<2x1x128xi32>
    %223 = arith.sitofp %222 : vector<2x1x128xi32> to vector<2x1x128xf32>
    %cst_87 = arith.constant 9.900000e-01 : f32
    %224 = vector.broadcast %cst_87 : f32 to vector<2x1x128xf32>
    %225 = arith.mulf %224, %219 : vector<2x1x128xf32>
    %226 = arith.addf %225, %203 : vector<2x1x128xf32>
    %227 = arith.subf %226, %223 : vector<2x1x128xf32>
    %cst_88 = arith.constant 1.000000e+00 : f32
    %228 = vector.broadcast %cst_88 : f32 to vector<2x1x128xf32>
    %229 = arith.cmpf ogt, %227, %228 : vector<2x1x128xf32>
    %230 = arith.extui %229 : vector<2x1x128xi1> to vector<2x1x128xi32>
    %231 = arith.sitofp %230 : vector<2x1x128xi32> to vector<2x1x128xf32>
    %cst_89 = arith.constant 9.900000e-01 : f32
    %232 = vector.broadcast %cst_89 : f32 to vector<2x1x128xf32>
    %233 = arith.mulf %232, %227 : vector<2x1x128xf32>
    %234 = arith.addf %233, %203 : vector<2x1x128xf32>
    %235 = arith.subf %234, %231 : vector<2x1x128xf32>
    %236 = vector.extract_strided_slice %102 {offsets = [0, 4, 0], sizes = [2, 1, 128], strides = [1, 1, 1]} : vector<2x8x128xf32> to vector<2x1x128xf32>
    %cst_90 = arith.constant 1.000000e+00 : f32
    %237 = vector.broadcast %cst_90 : f32 to vector<2x1x128xf32>
    %238 = arith.cmpf ogt, %235, %237 : vector<2x1x128xf32>
    %239 = arith.extui %238 : vector<2x1x128xi1> to vector<2x1x128xi32>
    %240 = arith.sitofp %239 : vector<2x1x128xi32> to vector<2x1x128xf32>
    %cst_91 = arith.constant 9.900000e-01 : f32
    %241 = vector.broadcast %cst_91 : f32 to vector<2x1x128xf32>
    %242 = arith.mulf %241, %235 : vector<2x1x128xf32>
    %243 = arith.addf %242, %236 : vector<2x1x128xf32>
    %244 = arith.subf %243, %240 : vector<2x1x128xf32>
    %cst_92 = arith.constant 1.000000e+00 : f32
    %245 = vector.broadcast %cst_92 : f32 to vector<2x1x128xf32>
    %246 = arith.cmpf ogt, %244, %245 : vector<2x1x128xf32>
    %247 = arith.extui %246 : vector<2x1x128xi1> to vector<2x1x128xi32>
    %248 = arith.sitofp %247 : vector<2x1x128xi32> to vector<2x1x128xf32>
    %cst_93 = arith.constant 9.900000e-01 : f32
    %249 = vector.broadcast %cst_93 : f32 to vector<2x1x128xf32>
    %250 = arith.mulf %249, %244 : vector<2x1x128xf32>
    %251 = arith.addf %250, %236 : vector<2x1x128xf32>
    %252 = arith.subf %251, %248 : vector<2x1x128xf32>
    %cst_94 = arith.constant 1.000000e+00 : f32
    %253 = vector.broadcast %cst_94 : f32 to vector<2x1x128xf32>
    %254 = arith.cmpf ogt, %252, %253 : vector<2x1x128xf32>
    %255 = arith.extui %254 : vector<2x1x128xi1> to vector<2x1x128xi32>
    %256 = arith.sitofp %255 : vector<2x1x128xi32> to vector<2x1x128xf32>
    %cst_95 = arith.constant 9.900000e-01 : f32
    %257 = vector.broadcast %cst_95 : f32 to vector<2x1x128xf32>
    %258 = arith.mulf %257, %252 : vector<2x1x128xf32>
    %259 = arith.addf %258, %236 : vector<2x1x128xf32>
    %260 = arith.subf %259, %256 : vector<2x1x128xf32>
    %cst_96 = arith.constant 1.000000e+00 : f32
    %261 = vector.broadcast %cst_96 : f32 to vector<2x1x128xf32>
    %262 = arith.cmpf ogt, %260, %261 : vector<2x1x128xf32>
    %263 = arith.extui %262 : vector<2x1x128xi1> to vector<2x1x128xi32>
    %264 = arith.sitofp %263 : vector<2x1x128xi32> to vector<2x1x128xf32>
    %cst_97 = arith.constant 9.900000e-01 : f32
    %265 = vector.broadcast %cst_97 : f32 to vector<2x1x128xf32>
    %266 = arith.mulf %265, %260 : vector<2x1x128xf32>
    %267 = arith.addf %266, %236 : vector<2x1x128xf32>
    %268 = arith.subf %267, %264 : vector<2x1x128xf32>
    %269 = vector.extract_strided_slice %102 {offsets = [0, 5, 0], sizes = [2, 1, 128], strides = [1, 1, 1]} : vector<2x8x128xf32> to vector<2x1x128xf32>
    %cst_98 = arith.constant 1.000000e+00 : f32
    %270 = vector.broadcast %cst_98 : f32 to vector<2x1x128xf32>
    %271 = arith.cmpf ogt, %268, %270 : vector<2x1x128xf32>
    %272 = arith.extui %271 : vector<2x1x128xi1> to vector<2x1x128xi32>
    %273 = arith.sitofp %272 : vector<2x1x128xi32> to vector<2x1x128xf32>
    %cst_99 = arith.constant 9.900000e-01 : f32
    %274 = vector.broadcast %cst_99 : f32 to vector<2x1x128xf32>
    %275 = arith.mulf %274, %268 : vector<2x1x128xf32>
    %276 = arith.addf %275, %269 : vector<2x1x128xf32>
    %277 = arith.subf %276, %273 : vector<2x1x128xf32>
    %cst_100 = arith.constant 1.000000e+00 : f32
    %278 = vector.broadcast %cst_100 : f32 to vector<2x1x128xf32>
    %279 = arith.cmpf ogt, %277, %278 : vector<2x1x128xf32>
    %280 = arith.extui %279 : vector<2x1x128xi1> to vector<2x1x128xi32>
    %281 = arith.sitofp %280 : vector<2x1x128xi32> to vector<2x1x128xf32>
    %cst_101 = arith.constant 9.900000e-01 : f32
    %282 = vector.broadcast %cst_101 : f32 to vector<2x1x128xf32>
    %283 = arith.mulf %282, %277 : vector<2x1x128xf32>
    %284 = arith.addf %283, %269 : vector<2x1x128xf32>
    %285 = arith.subf %284, %281 : vector<2x1x128xf32>
    %cst_102 = arith.constant 1.000000e+00 : f32
    %286 = vector.broadcast %cst_102 : f32 to vector<2x1x128xf32>
    %287 = arith.cmpf ogt, %285, %286 : vector<2x1x128xf32>
    %288 = arith.extui %287 : vector<2x1x128xi1> to vector<2x1x128xi32>
    %289 = arith.sitofp %288 : vector<2x1x128xi32> to vector<2x1x128xf32>
    %cst_103 = arith.constant 9.900000e-01 : f32
    %290 = vector.broadcast %cst_103 : f32 to vector<2x1x128xf32>
    %291 = arith.mulf %290, %285 : vector<2x1x128xf32>
    %292 = arith.addf %291, %269 : vector<2x1x128xf32>
    %293 = arith.subf %292, %289 : vector<2x1x128xf32>
    %cst_104 = arith.constant 1.000000e+00 : f32
    %294 = vector.broadcast %cst_104 : f32 to vector<2x1x128xf32>
    %295 = arith.cmpf ogt, %293, %294 : vector<2x1x128xf32>
    %296 = arith.extui %295 : vector<2x1x128xi1> to vector<2x1x128xi32>
    %297 = arith.sitofp %296 : vector<2x1x128xi32> to vector<2x1x128xf32>
    %cst_105 = arith.constant 9.900000e-01 : f32
    %298 = vector.broadcast %cst_105 : f32 to vector<2x1x128xf32>
    %299 = arith.mulf %298, %293 : vector<2x1x128xf32>
    %300 = arith.addf %299, %269 : vector<2x1x128xf32>
    %301 = arith.subf %300, %297 : vector<2x1x128xf32>
    %302 = vector.extract_strided_slice %102 {offsets = [0, 6, 0], sizes = [2, 1, 128], strides = [1, 1, 1]} : vector<2x8x128xf32> to vector<2x1x128xf32>
    %cst_106 = arith.constant 1.000000e+00 : f32
    %303 = vector.broadcast %cst_106 : f32 to vector<2x1x128xf32>
    %304 = arith.cmpf ogt, %301, %303 : vector<2x1x128xf32>
    %305 = arith.extui %304 : vector<2x1x128xi1> to vector<2x1x128xi32>
    %306 = arith.sitofp %305 : vector<2x1x128xi32> to vector<2x1x128xf32>
    %cst_107 = arith.constant 9.900000e-01 : f32
    %307 = vector.broadcast %cst_107 : f32 to vector<2x1x128xf32>
    %308 = arith.mulf %307, %301 : vector<2x1x128xf32>
    %309 = arith.addf %308, %302 : vector<2x1x128xf32>
    %310 = arith.subf %309, %306 : vector<2x1x128xf32>
    %cst_108 = arith.constant 1.000000e+00 : f32
    %311 = vector.broadcast %cst_108 : f32 to vector<2x1x128xf32>
    %312 = arith.cmpf ogt, %310, %311 : vector<2x1x128xf32>
    %313 = arith.extui %312 : vector<2x1x128xi1> to vector<2x1x128xi32>
    %314 = arith.sitofp %313 : vector<2x1x128xi32> to vector<2x1x128xf32>
    %cst_109 = arith.constant 9.900000e-01 : f32
    %315 = vector.broadcast %cst_109 : f32 to vector<2x1x128xf32>
    %316 = arith.mulf %315, %310 : vector<2x1x128xf32>
    %317 = arith.addf %316, %302 : vector<2x1x128xf32>
    %318 = arith.subf %317, %314 : vector<2x1x128xf32>
    %cst_110 = arith.constant 1.000000e+00 : f32
    %319 = vector.broadcast %cst_110 : f32 to vector<2x1x128xf32>
    %320 = arith.cmpf ogt, %318, %319 : vector<2x1x128xf32>
    %321 = arith.extui %320 : vector<2x1x128xi1> to vector<2x1x128xi32>
    %322 = arith.sitofp %321 : vector<2x1x128xi32> to vector<2x1x128xf32>
    %cst_111 = arith.constant 9.900000e-01 : f32
    %323 = vector.broadcast %cst_111 : f32 to vector<2x1x128xf32>
    %324 = arith.mulf %323, %318 : vector<2x1x128xf32>
    %325 = arith.addf %324, %302 : vector<2x1x128xf32>
    %326 = arith.subf %325, %322 : vector<2x1x128xf32>
    %cst_112 = arith.constant 1.000000e+00 : f32
    %327 = vector.broadcast %cst_112 : f32 to vector<2x1x128xf32>
    %328 = arith.cmpf ogt, %326, %327 : vector<2x1x128xf32>
    %329 = arith.extui %328 : vector<2x1x128xi1> to vector<2x1x128xi32>
    %330 = arith.sitofp %329 : vector<2x1x128xi32> to vector<2x1x128xf32>
    %cst_113 = arith.constant 9.900000e-01 : f32
    %331 = vector.broadcast %cst_113 : f32 to vector<2x1x128xf32>
    %332 = arith.mulf %331, %326 : vector<2x1x128xf32>
    %333 = arith.addf %332, %302 : vector<2x1x128xf32>
    %334 = arith.subf %333, %330 : vector<2x1x128xf32>
    %335 = vector.extract_strided_slice %102 {offsets = [0, 7, 0], sizes = [2, 1, 128], strides = [1, 1, 1]} : vector<2x8x128xf32> to vector<2x1x128xf32>
    %cst_114 = arith.constant 1.000000e+00 : f32
    %336 = vector.broadcast %cst_114 : f32 to vector<2x1x128xf32>
    %337 = arith.cmpf ogt, %334, %336 : vector<2x1x128xf32>
    %338 = arith.extui %337 : vector<2x1x128xi1> to vector<2x1x128xi32>
    %339 = arith.sitofp %338 : vector<2x1x128xi32> to vector<2x1x128xf32>
    %cst_115 = arith.constant 9.900000e-01 : f32
    %340 = vector.broadcast %cst_115 : f32 to vector<2x1x128xf32>
    %341 = arith.mulf %340, %334 : vector<2x1x128xf32>
    %342 = arith.addf %341, %335 : vector<2x1x128xf32>
    %343 = arith.subf %342, %339 : vector<2x1x128xf32>
    %cst_116 = arith.constant 1.000000e+00 : f32
    %344 = vector.broadcast %cst_116 : f32 to vector<2x1x128xf32>
    %345 = arith.cmpf ogt, %343, %344 : vector<2x1x128xf32>
    %346 = arith.extui %345 : vector<2x1x128xi1> to vector<2x1x128xi32>
    %347 = arith.sitofp %346 : vector<2x1x128xi32> to vector<2x1x128xf32>
    %cst_117 = arith.constant 1.000000e+00 : f32
    %348 = vector.broadcast %cst_117 : f32 to vector<2x1x128xf32>
    %349 = arith.cmpf ogt, %343, %348 : vector<2x1x128xf32>
    %350 = arith.extui %349 : vector<2x1x128xi1> to vector<2x1x128xi32>
    %351 = arith.sitofp %350 : vector<2x1x128xi32> to vector<2x1x128xf32>
    %cst_118 = arith.constant 9.900000e-01 : f32
    %352 = vector.broadcast %cst_118 : f32 to vector<2x1x128xf32>
    %353 = arith.mulf %352, %343 : vector<2x1x128xf32>
    %354 = arith.addf %353, %335 : vector<2x1x128xf32>
    %355 = arith.subf %354, %351 : vector<2x1x128xf32>
    %cst_119 = arith.constant 1.000000e+00 : f32
    %356 = vector.broadcast %cst_119 : f32 to vector<2x1x128xf32>
    %357 = arith.cmpf ogt, %355, %356 : vector<2x1x128xf32>
    %358 = arith.extui %357 : vector<2x1x128xi1> to vector<2x1x128xi32>
    %359 = arith.sitofp %358 : vector<2x1x128xi32> to vector<2x1x128xf32>
    %cst_120 = arith.constant 1.000000e+00 : f32
    %360 = vector.broadcast %cst_120 : f32 to vector<2x1x128xf32>
    %361 = arith.cmpf ogt, %355, %360 : vector<2x1x128xf32>
    %362 = arith.extui %361 : vector<2x1x128xi1> to vector<2x1x128xi32>
    %363 = arith.sitofp %362 : vector<2x1x128xi32> to vector<2x1x128xf32>
    %cst_121 = arith.constant 9.900000e-01 : f32
    %364 = vector.broadcast %cst_121 : f32 to vector<2x1x128xf32>
    %365 = arith.mulf %364, %355 : vector<2x1x128xf32>
    %366 = arith.addf %365, %335 : vector<2x1x128xf32>
    %367 = arith.subf %366, %363 : vector<2x1x128xf32>
    %cst_122 = arith.constant 1.000000e+00 : f32
    %368 = vector.broadcast %cst_122 : f32 to vector<2x1x128xf32>
    %369 = arith.cmpf ogt, %367, %368 : vector<2x1x128xf32>
    %370 = arith.extui %369 : vector<2x1x128xi1> to vector<2x1x128xi32>
    %371 = arith.sitofp %370 : vector<2x1x128xi32> to vector<2x1x128xf32>
    %cst_123 = arith.constant 1.000000e+00 : f32
    %372 = vector.broadcast %cst_123 : f32 to vector<2x1x128xf32>
    %373 = arith.cmpf ogt, %367, %372 : vector<2x1x128xf32>
    %374 = arith.extui %373 : vector<2x1x128xi1> to vector<2x1x128xi32>
    %375 = arith.sitofp %374 : vector<2x1x128xi32> to vector<2x1x128xf32>
    %cst_124 = arith.constant 9.900000e-01 : f32
    %376 = vector.broadcast %cst_124 : f32 to vector<2x1x128xf32>
    %377 = arith.mulf %376, %367 : vector<2x1x128xf32>
    %378 = arith.addf %377, %335 : vector<2x1x128xf32>
    %379 = arith.subf %378, %375 : vector<2x1x128xf32>
    %cst_125 = arith.constant 1.000000e+00 : f32
    %380 = vector.broadcast %cst_125 : f32 to vector<2x1x128xf32>
    %381 = arith.cmpf ogt, %379, %380 : vector<2x1x128xf32>
    %382 = arith.extui %381 : vector<2x1x128xi1> to vector<2x1x128xi32>
    %383 = arith.sitofp %382 : vector<2x1x128xi32> to vector<2x1x128xf32>
    %384 = vector.shape_cast %347 : vector<2x1x128xf32> to vector<1x2x1x128xf32>
    %385 = vector.shape_cast %359 : vector<2x1x128xf32> to vector<1x2x1x128xf32>
    %386 = vector.shape_cast %371 : vector<2x1x128xf32> to vector<1x2x1x128xf32>
    %387 = vector.shape_cast %383 : vector<2x1x128xf32> to vector<1x2x1x128xf32>
    %388 = tpu.concatenate %384, %385, %386, %387 in 0 : vector<1x2x1x128xf32>, vector<1x2x1x128xf32>, vector<1x2x1x128xf32>, vector<1x2x1x128xf32> -> vector<4x2x1x128xf32>
    %c0_126 = arith.constant 0 : index
    %c0_127 = arith.constant 0 : index
    %c0_128 = arith.constant 0 : index
    %c0_129 = arith.constant 0 : index
    %389 = vector.load %arg9[%c0_126, %c0_127, %c0_128, %c0_129] : memref<4x2x1x128xf32, #tpu.memory_space<vmem>>, vector<4x2x1x128xf32>
    tpu.vector_store %arg9[%c0_126, %c0_127, %c0_128, %c0_129], %388 {strides = array<i32>} : memref<4x2x1x128xf32, #tpu.memory_space<vmem>>, vector<4x2x1x128xf32>,
    return
  }
  func.func @transform_0(%arg0: i32) -> (i32, i32, i32) {
    %c0_i32 = arith.constant 0 : i32
    %c0_i32_0 = arith.constant 0 : i32
    %c0_i32_1 = arith.constant 0 : i32
    %c0_i32_2 = arith.constant 0 : i32
    return %c0_i32, %c0_i32_0, %c0_i32_1 : i32, i32, i32
  }
  func.func @transform_1(%arg0: i32) -> (i32, i32) {
    %c0_i32 = arith.constant 0 : i32
    %c0_i32_0 = arith.constant 0 : i32
    %c0_i32_1 = arith.constant 0 : i32
    return %c0_i32, %c0_i32_0 : i32, i32
  }
  func.func @transform_2(%arg0: i32) -> (i32, i32) {
    %c0_i32 = arith.constant 0 : i32
    %c0_i32_0 = arith.constant 0 : i32
    %c0_i32_1 = arith.constant 0 : i32
    return %c0_i32, %c0_i32_0 : i32, i32
  }
  func.func @transform_3(%arg0: i32) -> (i32, i32) {
    %c0_i32 = arith.constant 0 : i32
    %c0_i32_0 = arith.constant 0 : i32
    %c0_i32_1 = arith.constant 0 : i32
    return %c0_i32, %c0_i32_0 : i32, i32
  }
  func.func @transform_4(%arg0: i32) -> (i32, i32) {
    %c0_i32 = arith.constant 0 : i32
    %c0_i32_0 = arith.constant 0 : i32
    %c0_i32_1 = arith.constant 0 : i32
    return %c0_i32, %c0_i32_0 : i32, i32
  }
  func.func @transform_5(%arg0: i32) -> (i32, i32, i32) {
    %c0_i32 = arith.constant 0 : i32
    %c0_i32_0 = arith.constant 0 : i32
    %c0_i32_1 = arith.constant 0 : i32
    %c0_i32_2 = arith.constant 0 : i32
    return %c0_i32, %c0_i32_0, %c0_i32_1 : i32, i32, i32
  }
  func.func @transform_6(%arg0: i32) -> (i32, i32, i32) {
    %c0_i32 = arith.constant 0 : i32
    %c0_i32_0 = arith.constant 0 : i32
    %c0_i32_1 = arith.constant 0 : i32
    %c0_i32_2 = arith.constant 0 : i32
    return %c0_i32, %c0_i32_0, %c0_i32_1 : i32, i32, i32
  }
  func.func @transform_7(%arg0: i32) -> (i32, i32, i32) {
    %c0_i32 = arith.constant 0 : i32
    %c0_i32_0 = arith.constant 0 : i32
    %c0_i32_1 = arith.constant 0 : i32
    %c0_i32_2 = arith.constant 0 : i32
    return %c0_i32, %c0_i32_0, %c0_i32_1 : i32, i32, i32
  }
  func.func @transform_8(%arg0: i32) -> (i32, i32, i32, i32) {
    %c0_i32 = arith.constant 0 : i32
    %c0_i32_0 = arith.constant 0 : i32
    %c0_i32_1 = arith.constant 0 : i32
    %c0_i32_2 = arith.constant 0 : i32
    %c0_i32_3 = arith.constant 0 : i32
    return %c0_i32, %c0_i32_0, %c0_i32_1, %c0_i32_2 : i32, i32, i32, i32
  }
}

</mosaic_0001>

<llo_original>
// kernel: _lambda_.1
$region0: #{_lambda_.1}
  #allocation0 [shape = 'u32[]', space=smem, size = 0x4, offset = 0x4, fixed_abs, tag = 'smem constant byte address 0x4 - core index']
  #allocation1 [shape = 'u32[144,128]{1,0:T(1,128)}', space=vmem, size = 0x12000, scoped, tag = 'internal scratch']
  %s0 = inlined_call_operand.vmem [shape: f32[2,10,1], index: 0, kind: input, shape index: {}]
  %s1 = inlined_call_operand.vmem [shape: f32[3,128], index: 1, kind: input, shape index: {}]
  %s2 = inlined_call_operand.vmem [shape: f32[1,128], index: 2, kind: input, shape index: {}]
  %s3 = inlined_call_operand.vmem [shape: f32[1,128], index: 3, kind: input, shape index: {}]
  %s4 = inlined_call_operand.vmem [shape: f32[1,128], index: 4, kind: input, shape index: {}]
  %s5 = inlined_call_operand.hbm [shape: bf16[3,128,128], index: 5, kind: input, shape index: {}]
  %s6 = inlined_call_operand.vmem [shape: f32[3,1,128], index: 6, kind: input, shape index: {}]
  %s7 = inlined_call_operand.vmem [shape: f32[3,1,128], index: 7, kind: input, shape index: {}]
  %s8 = inlined_call_operand.vmem [shape: f32[4,2,1,128], index: 8, kind: output, shape index: {}]
  %s9 = sld [smem:[#allocation0]]
  $region46: #{_lambda_.1} parent=0
    _
  %s11 = ssub.s32 1, %s9
  %s12 = scalar_select 0, %s11, %s9
  $region1: #{_lambda_.1} parent=0
    #allocation2 [shape = 'u8[98304]{0}', space=vmem, size = 0x18000, scoped, tag = 'input window, operand 5, single buffered']
    #allocation3 [shape = 's32[1]{0}', space=sflag, size = 0x4, scoped, tag = 'scoped memory for _lambda_.1']
    %13 = vsyncpa [#allocation3], 0
    // Predicated region
    $region2: #{_lambda_.1} parent=1 // pred_check
      _
    $region3: #{_lambda_.1} parent=1 // pred_check_branch
      %15 = sbr.rel (0) target = $region5
    $region4: #{_lambda_.1} parent=1 // pred_region
      _
    $region5: #{_lambda_.1} parent=1 // pred_fallthru
      _
    // Predicated region
    $region6: #{_lambda_.1} parent=1 // pred_check
      _
    $region7: #{_lambda_.1} parent=1 // pred_check_branch
      %17 = sbr.rel (0) target = $region9
    $region8: #{_lambda_.1} parent=1 // pred_region
      _
    $region9: #{_lambda_.1} parent=1 // pred_fallthru
      _
    // Predicated region
    $region10: #{_lambda_.1} parent=1 // pred_check
      _
    $region11: #{_lambda_.1} parent=1 // pred_check_branch
      %19 = sbr.rel (0) target = $region13
    $region12: #{_lambda_.1} parent=1 // pred_region
      _
    $region13: #{_lambda_.1} parent=1 // pred_fallthru
      _
    // Predicated region
    $region14: #{_lambda_.1} parent=1 // pred_check
      _
    $region15: #{_lambda_.1} parent=1 // pred_check_branch
      %21 = sbr.rel (0) target = $region17
    $region16: #{_lambda_.1} parent=1 // pred_region
      _
    $region17: #{_lambda_.1} parent=1 // pred_fallthru
      _
    // Predicated region
    $region18: #{_lambda_.1} parent=1 // pred_check
      _
    $region19: #{_lambda_.1} parent=1 // pred_check_branch
      %23 = sbr.rel (0) target = $region21
    $region20: #{_lambda_.1} parent=1 // pred_region
      _
    $region21: #{_lambda_.1} parent=1 // pred_fallthru
      _
    // Predicated region
    $region22: #{_lambda_.1} parent=1 // pred_check
      _
    $region23: #{_lambda_.1} parent=1 // pred_check_branch
      %25 = sbr.rel (0) target = $region25
    $region24: #{_lambda_.1} parent=1 // pred_region
      %s27 = ssub.s32 3072, 3072
      %28 = vsyncadd [#allocation3], %s27
      %s29 = sshll.u32 [#allocation2], 4
      %s30 = int_to_ptr.vmem [resolvable:$true] %s29
      %35 = dma.hbm_to_vmem [thread:$0]  %s5, 3072, %s30, [#allocation3], 64, 64, 4
    $region25: #{_lambda_.1} parent=1 // pred_fallthru
      _
    // Predicated region
    $region26: #{_lambda_.1} parent=1 // pred_check
      _
    $region27: #{_lambda_.1} parent=1 // pred_check_branch
      %37 = sbr.rel (0) target = $region29
    $region28: #{_lambda_.1} parent=1 // pred_region
      _
    $region29: #{_lambda_.1} parent=1 // pred_fallthru
      _
    // Predicated region
    $region30: #{_lambda_.1} parent=1 // pred_check
      _
    $region31: #{_lambda_.1} parent=1 // pred_check_branch
      %39 = sbr.rel (0) target = $region33
    $region32: #{_lambda_.1} parent=1 // pred_region
      _
    $region33: #{_lambda_.1} parent=1 // pred_fallthru
      _
    // Predicated region
    $region34: #{_lambda_.1} parent=1 // pred_check
      _
    $region35: #{_lambda_.1} parent=1 // pred_check_branch
      %41 = sbr.rel (0) target = $region37
    $region36: #{_lambda_.1} parent=1 // pred_region
      %42 = dma.done [#allocation3], 3072
    $region37: #{_lambda_.1} parent=1 // pred_fallthru
      _
    %v44 = vld [vmem:[%s0] sm:$0xff]
    %v45 = vld [vmem:[%s0 + $0x10] sm:$0xff]
    %v46 = vld [vmem:[%s1] sm:$0x1]
    %48 = vset.pattern.permute.xlu0 0
    %49 = vperm.xlu0 %48, %v44
    %v50 = vpop.permute.xlu0 %49
    %53 = vset.pattern.permute.xlu0 0
    %54 = vperm.xlu0 %53, %v45
    %v55 = vpop.permute.xlu0 %54
    %v57 = vlaneseq
    %v58 = vshrl.u32 %v57, 7
    %v59 = vsub.s32 0, %v58
    %v60 = vrot.slane %v46, %v59
    %v61 = vmul.f32 %v50, %v60
    %v62 = vmul.f32 %v55, %v60
    %v63 = vld [vmem:[%s0 + $0x1] sm:$0xff]
    %v64 = vld [vmem:[%s0 + $0x11] sm:$0xff]
    %v65 = vld [vmem:[%s1 + $0x1] sm:$0x1]
    %67 = vset.pattern.permute.xlu0 0
    %68 = vperm.xlu0 %67, %v63
    %v69 = vpop.permute.xlu0 %68
    %72 = vset.pattern.permute.xlu0 0
    %73 = vperm.xlu0 %72, %v64
    %v74 = vpop.permute.xlu0 %73
    %v76 = vlaneseq
    %v77 = vshrl.u32 %v76, 7
    %v78 = vsub.s32 0, %v77
    %v79 = vrot.slane %v65, %v78
    %v80 = vmul.f32 %v69, %v79
    %v81 = vmul.f32 %v74, %v79
    %v82 = vadd.f32 %v61, %v80
    %v83 = vadd.f32 %v62, %v81
    %v84 = vld [vmem:[%s0 + $0x2] sm:$0xff]
    %v85 = vld [vmem:[%s0 + $0x12] sm:$0xff]
    %v86 = vld [vmem:[%s1 + $0x2] sm:$0x1]
    %88 = vset.pattern.permute.xlu0 0
    %89 = vperm.xlu0 %88, %v84
    %v90 = vpop.permute.xlu0 %89
    %93 = vset.pattern.permute.xlu0 0
    %94 = vperm.xlu0 %93, %v85
    %v95 = vpop.permute.xlu0 %94
    %v97 = vlaneseq
    %v98 = vshrl.u32 %v97, 7
    %v99 = vsub.s32 0, %v98
    %v100 = vrot.slane %v86, %v99
    %v101 = vmul.f32 %v90, %v100
    %v102 = vmul.f32 %v95, %v100
    %v103 = vadd.f32 %v82, %v101
    %v104 = vadd.f32 %v83, %v102
    %v105 = vld [vmem:[%s2] sm:$0x1]
    %v107 = vlaneseq
    %v108 = vshrl.u32 %v107, 7
    %v109 = vsub.s32 0, %v108
    %v110 = vrot.slane %v105, %v109
    %v112 = vadd.f32 %v103, %v110
    %v113 = vadd.f32 %v104, %v110
    %v114 = vadd.f32 %v112, %v113
    %v115 = vrot.slane %v114, 4
    %v116 = vadd.f32 %v114, %v115
    %v117 = vrot.slane %v116, 2
    %v118 = vadd.f32 %v116, %v117
    %v119 = vrot.slane %v118, 1
    %v120 = vadd.f32 %v118, %v119
    %v121 = vmul.f32 %v120, 0.0625
    %v122 = vmul.f32 %v112, %v112
    %v123 = vmul.f32 %v113, %v113
    %v124 = vadd.f32 %v122, %v123
    %v125 = vrot.slane %v124, 4
    %v126 = vadd.f32 %v124, %v125
    %v127 = vrot.slane %v126, 2
    %v128 = vadd.f32 %v126, %v127
    %v129 = vrot.slane %v128, 1
    %v130 = vadd.f32 %v128, %v129
    %v131 = vmul.f32 %v130, 0.0625
    %v132 = vmul.f32 %v121, %v121
    %v133 = vsub.f32 %v131, %v132
    %v134 = vsub.f32 %v112, %v121
    %v135 = vsub.f32 %v113, %v121
    %v136 = vadd.f32 %v133, 1e-05
    %v137 = vrsqrt.pop %v136
    %v138 = vld [vmem:[%s3] sm:$0x1]
    %v139 = vmul.f32 %v137, %v138
    %v140 = vlaneseq
    %v141 = vshrl.u32 %v140, 7
    %v142 = vsub.s32 0, %v141
    %v143 = vrot.slane %v139, %v142
    %v144 = vmul.f32 %v134, %v143
    %v145 = vmul.f32 %v135, %v143
    %v146 = vld [vmem:[%s4] sm:$0x1]
    %v148 = vlaneseq
    %v149 = vshrl.u32 %v148, 7
    %v150 = vsub.s32 0, %v149
    %v151 = vrot.slane %v146, %v150
    %v153 = vadd.f32 %v144, %v151
    %v154 = vadd.f32 %v145, %v151
    %vm155 = vcmp.gt.f32.partialorder %v153, 1.0
    %vm156 = vcmp.gt.f32.partialorder %v154, 1.0
    %v157 = vsel %vm155, 1, 0
    %v158 = vsel %vm156, 1, 0
    %v159 = vcvt.s32.f32 %v157
    %v160 = vcvt.s32.f32 %v158
    %v161 = vpack.c.bf16 %v160, %v159
    %v162 = vld [vmem:[#allocation2] sm:$0xf]
    %v163 = vld [vmem:[#allocation2 + $0x4] sm:$0xf]
    %v164 = vld [vmem:[#allocation2 + $0x8] sm:$0xf]
    %v165 = vld [vmem:[#allocation2 + $0xc] sm:$0xf]
    %v166 = vld [vmem:[#allocation2 + $0x10] sm:$0xf]
    %v167 = vld [vmem:[#allocation2 + $0x14] sm:$0xf]
    %v168 = vld [vmem:[#allocation2 + $0x18] sm:$0xf]
    %v169 = vld [vmem:[#allocation2 + $0x1c] sm:$0xf]
    %v170 = vld [vmem:[#allocation2 + $0x20] sm:$0xf]
    %v171 = vld [vmem:[#allocation2 + $0x24] sm:$0xf]
    %v172 = vld [vmem:[#allocation2 + $0x28] sm:$0xf]
    %v173 = vld [vmem:[#allocation2 + $0x2c] sm:$0xf]
    %v174 = vld [vmem:[#allocation2 + $0x30] sm:$0xf]
    %v175 = vld [vmem:[#allocation2 + $0x34] sm:$0xf]
    %v176 = vld [vmem:[#allocation2 + $0x38] sm:$0xf]
    %v177 = vld [vmem:[#allocation2 + $0x3c] sm:$0xf]
    %v178 = vld [vmem:[%s6] sm:$0x1]
    %v180 = vlaneseq
    %v181 = vshrl.u32 %v180, 7
    %v182 = vsub.s32 0, %v181
    %v183 = vrot.slane %v178, %v182
    %v201 = vunpack.c.l.b16 %v162
    %v202 = vunpack.c.l.b16 %v163
    %v203 = vunpack.c.l.b16 %v164
    %v204 = vunpack.c.l.b16 %v165
    %v205 = vunpack.c.l.b16 %v166
    %v206 = vunpack.c.l.b16 %v167
    %v207 = vunpack.c.l.b16 %v168
    %v208 = vunpack.c.l.b16 %v169
    %v209 = vunpack.c.l.b16 %v170
    %v210 = vunpack.c.l.b16 %v171
    %v211 = vunpack.c.l.b16 %v172
    %v212 = vunpack.c.l.b16 %v173
    %v213 = vunpack.c.l.b16 %v174
    %v214 = vunpack.c.l.b16 %v175
    %v215 = vunpack.c.l.b16 %v176
    %v216 = vunpack.c.l.b16 %v177
    %v217 = vpack.c.b16 %v202, %v201
    %v218 = vpack.c.b16 %v204, %v203
    %v219 = vpack.c.b16 %v206, %v205
    %v220 = vpack.c.b16 %v208, %v207
    %v221 = vpack.c.b16 %v210, %v209
    %v222 = vpack.c.b16 %v212, %v211
    %v223 = vpack.c.b16 %v214, %v213
    %v224 = vpack.c.b16 %v216, %v215
    %233 = vmatprep.subr.bf16.mxu0 0
    %234 = vmatpush1.bf16.msra.mxu0 %v217
    %235 = vmatprep.subr.bf16.mxu0 0
    %236 = vmatpush1.bf16.msra.mxu0 %v218
    %237 = vmatprep.subr.bf16.mxu0 0
    %238 = vmatpush1.bf16.msra.mxu0 %v219
    %239 = vmatprep.subr.bf16.mxu0 0
    %240 = vmatpush1.bf16.msra.mxu0 %v220
    %241 = vmatprep.subr.bf16.mxu0 0
    %242 = vmatpush1.bf16.msra.mxu0 %v221
    %243 = vmatprep.subr.bf16.mxu0 0
    %244 = vmatpush1.bf16.msra.mxu0 %v222
    %245 = vmatprep.subr.bf16.mxu0 0
    %246 = vmatpush1.bf16.msra.mxu0 %v223
    %247 = vmatprep.subr.bf16.mxu0 0
    %248 = vmatpush1.bf16.msra.mxu0 %v224
    %249 = vmatprep.subr.bf16.mxu0 0
    %250 = vmatpush1.bf16.msra.mxu0 0
    %251 = vmatprep.subr.bf16.mxu0 0
    %252 = vmatpush1.bf16.msra.mxu0 0
    %253 = vmatprep.subr.bf16.mxu0 0
    %254 = vmatpush1.bf16.msra.mxu0 0
    %255 = vmatprep.subr.bf16.mxu0 0
    %256 = vmatpush1.bf16.msra.mxu0 0
    %257 = vmatprep.subr.bf16.mxu0 0
    %258 = vmatpush1.bf16.msra.mxu0 0
    %259 = vmatprep.subr.bf16.mxu0 0
    %260 = vmatpush1.bf16.msra.mxu0 0
    %261 = vmatprep.subr.bf16.mxu0 0
    %262 = vmatpush1.bf16.msra.mxu0 0
    %263 = vmatprep.subr.bf16.mxu0 0
    %264 = vmatpush1.bf16.msra.mxu0 0
    %265 = vmatprep.mubr.bf16.mxu0 0
    %266 = vmatmul.mubr.bf16.gmra.mrb[0].mxu0 %v161
    %v267 = vpop.f32.mrb[0].mxu0
    %v268 = vadd.f32 %v183, %v267
    %v269 = vpop.f32.mrb[0].mxu0
    %v270 = vpop.f32.mrb[0].mxu0
    %v271 = vadd.f32 %v183, %v270
    %v272 = vpop.f32.mrb[0].mxu0
    %273 = vdwg.mxu0
    %v274 = vld [vmem:[%s7] sm:$0x1]
    %v276 = vlaneseq
    %v277 = vshrl.u32 %v276, 7
    %v278 = vsub.s32 0, %v277
    %v279 = vrot.slane %v274, %v278
    %v281 = vadd.f32 %v268, %v279
    %v282 = vadd.f32 %v271, %v279
    %vm283 = vcmp.ge.f32.partialorder %v281, 0.0
    %vm284 = vcmp.ge.f32.partialorder %v282, 0.0
    %v285 = vsel %vm283, 1, 0
    %v286 = vsel %vm284, 1, 0
    %v287 = vcvt.s32.f32 %v285
    %v288 = vcvt.s32.f32 %v286
    %s289 = scalar_lea.vmem [#allocation2], 64
    %v290 = vld [vmem:[%s289] sm:$0xf]
    %v291 = vld [vmem:[%s289 + $0x4] sm:$0xf]
    %v292 = vld [vmem:[%s289 + $0x8] sm:$0xf]
    %v293 = vld [vmem:[%s289 + $0xc] sm:$0xf]
    %v294 = vld [vmem:[%s289 + $0x10] sm:$0xf]
    %v295 = vld [vmem:[%s289 + $0x14] sm:$0xf]
    %v296 = vld [vmem:[%s289 + $0x18] sm:$0xf]
    %v297 = vld [vmem:[%s289 + $0x1c] sm:$0xf]
    %v298 = vld [vmem:[%s289 + $0x20] sm:$0xf]
    %v299 = vld [vmem:[%s289 + $0x24] sm:$0xf]
    %v300 = vld [vmem:[%s289 + $0x28] sm:$0xf]
    %v301 = vld [vmem:[%s289 + $0x2c] sm:$0xf]
    %v302 = vld [vmem:[%s289 + $0x30] sm:$0xf]
    %v303 = vld [vmem:[%s289 + $0x34] sm:$0xf]
    %v304 = vld [vmem:[%s289 + $0x38] sm:$0xf]
    %v305 = vld [vmem:[%s289 + $0x3c] sm:$0xf]
    %s306 = scalar_lea.vmem %s6, 1
    %v307 = vld [vmem:[%s306] sm:$0x1]
    %v309 = vlaneseq
    %v310 = vshrl.u32 %v309, 7
    %v311 = vsub.s32 0, %v310
    %v312 = vrot.slane %v307, %v311
    %v330 = vunpack.c.l.b16 %v290
    %v331 = vunpack.c.l.b16 %v291
    %v332 = vunpack.c.l.b16 %v292
    %v333 = vunpack.c.l.b16 %v293
    %v334 = vunpack.c.l.b16 %v294
    %v335 = vunpack.c.l.b16 %v295
    %v336 = vunpack.c.l.b16 %v296
    %v337 = vunpack.c.l.b16 %v297
    %v338 = vunpack.c.l.b16 %v298
    %v339 = vunpack.c.l.b16 %v299
    %v340 = vunpack.c.l.b16 %v300
    %v341 = vunpack.c.l.b16 %v301
    %v342 = vunpack.c.l.b16 %v302
    %v343 = vunpack.c.l.b16 %v303
    %v344 = vunpack.c.l.b16 %v304
    %v345 = vunpack.c.l.b16 %v305
    %v346 = vpack.c.b16 %v331, %v330
    %v347 = vpack.c.b16 %v333, %v332
    %v348 = vpack.c.b16 %v335, %v334
    %v349 = vpack.c.b16 %v337, %v336
    %v350 = vpack.c.b16 %v339, %v338
    %v351 = vpack.c.b16 %v341, %v340
    %v352 = vpack.c.b16 %v343, %v342
    %v353 = vpack.c.b16 %v345, %v344
    %362 = vmatprep.subr.bf16.mxu0 0
    %363 = vmatpush1.bf16.msra.mxu0 %v346
    %364 = vmatprep.subr.bf16.mxu0 0
    %365 = vmatpush1.bf16.msra.mxu0 %v347
    %366 = vmatprep.subr.bf16.mxu0 0
    %367 = vmatpush1.bf16.msra.mxu0 %v348
    %368 = vmatprep.subr.bf16.mxu0 0
    %369 = vmatpush1.bf16.msra.mxu0 %v349
    %370 = vmatprep.subr.bf16.mxu0 0
    %371 = vmatpush1.bf16.msra.mxu0 %v350
    %372 = vmatprep.subr.bf16.mxu0 0
    %373 = vmatpush1.bf16.msra.mxu0 %v351
    %374 = vmatprep.subr.bf16.mxu0 0
    %375 = vmatpush1.bf16.msra.mxu0 %v352
    %376 = vmatprep.subr.bf16.mxu0 0
    %377 = vmatpush1.bf16.msra.mxu0 %v353
    %378 = vmatprep.subr.bf16.mxu0 0
    %379 = vmatpush1.bf16.msra.mxu0 0
    %380 = vmatprep.subr.bf16.mxu0 0
    %381 = vmatpush1.bf16.msra.mxu0 0
    %382 = vmatprep.subr.bf16.mxu0 0
    %383 = vmatpush1.bf16.msra.mxu0 0
    %384 = vmatprep.subr.bf16.mxu0 0
    %385 = vmatpush1.bf16.msra.mxu0 0
    %386 = vmatprep.subr.bf16.mxu0 0
    %387 = vmatpush1.bf16.msra.mxu0 0
    %388 = vmatprep.subr.bf16.mxu0 0
    %389 = vmatpush1.bf16.msra.mxu0 0
    %390 = vmatprep.subr.bf16.mxu0 0
    %391 = vmatpush1.bf16.msra.mxu0 0
    %392 = vmatprep.subr.bf16.mxu0 0
    %393 = vmatpush1.bf16.msra.mxu0 0
    %394 = vmatprep.mubr.bf16.mxu0 0
    %395 = vmatmul.mubr.bf16.gmra.mrb[0].mxu0 %v161
    %v396 = vpop.f32.mrb[0].mxu0
    %v397 = vadd.f32 %v312, %v396
    %v398 = vpop.f32.mrb[0].mxu0
    %v399 = vpop.f32.mrb[0].mxu0
    %v400 = vadd.f32 %v312, %v399
    %v401 = vpop.f32.mrb[0].mxu0
    %402 = vdwg.mxu0
    %s403 = scalar_lea.vmem %s7, 1
    %v404 = vld [vmem:[%s403] sm:$0x1]
    %v406 = vlaneseq
    %v407 = vshrl.u32 %v406, 7
    %v408 = vsub.s32 0, %v407
    %v409 = vrot.slane %v404, %v408
    %v411 = vadd.f32 %v397, %v409
    %v412 = vadd.f32 %v400, %v409
    %vm413 = vcmp.ge.f32.partialorder %v411, 0.0
    %vm414 = vcmp.ge.f32.partialorder %v412, 0.0
    %v415 = vsel %vm413, 1, 0
    %v416 = vsel %vm414, 1, 0
    %v417 = vcvt.s32.f32 %v415
    %v418 = vcvt.s32.f32 %v416
    %s419 = scalar_lea.vmem [#allocation2], 128
    %v420 = vld [vmem:[%s419] sm:$0xf]
    %v421 = vld [vmem:[%s419 + $0x4] sm:$0xf]
    %v422 = vld [vmem:[%s419 + $0x8] sm:$0xf]
    %v423 = vld [vmem:[%s419 + $0xc] sm:$0xf]
    %v424 = vld [vmem:[%s419 + $0x10] sm:$0xf]
    %v425 = vld [vmem:[%s419 + $0x14] sm:$0xf]
    %v426 = vld [vmem:[%s419 + $0x18] sm:$0xf]
    %v427 = vld [vmem:[%s419 + $0x1c] sm:$0xf]
    %v428 = vld [vmem:[%s419 + $0x20] sm:$0xf]
    %v429 = vld [vmem:[%s419 + $0x24] sm:$0xf]
    %v430 = vld [vmem:[%s419 + $0x28] sm:$0xf]
    %v431 = vld [vmem:[%s419 + $0x2c] sm:$0xf]
    %v432 = vld [vmem:[%s419 + $0x30] sm:$0xf]
    %v433 = vld [vmem:[%s419 + $0x34] sm:$0xf]
    %v434 = vld [vmem:[%s419 + $0x38] sm:$0xf]
    %v435 = vld [vmem:[%s419 + $0x3c] sm:$0xf]
    %s436 = scalar_lea.vmem %s6, 2
    %v437 = vld [vmem:[%s436] sm:$0x1]
    %v439 = vlaneseq
    %v440 = vshrl.u32 %v439, 7
    %v441 = vsub.s32 0, %v440
    %v442 = vrot.slane %v437, %v441
    %v460 = vunpack.c.l.b16 %v420
    %v461 = vunpack.c.l.b16 %v421
    %v462 = vunpack.c.l.b16 %v422
    %v463 = vunpack.c.l.b16 %v423
    %v464 = vunpack.c.l.b16 %v424
    %v465 = vunpack.c.l.b16 %v425
    %v466 = vunpack.c.l.b16 %v426
    %v467 = vunpack.c.l.b16 %v427
    %v468 = vunpack.c.l.b16 %v428
    %v469 = vunpack.c.l.b16 %v429
    %v470 = vunpack.c.l.b16 %v430
    %v471 = vunpack.c.l.b16 %v431
    %v472 = vunpack.c.l.b16 %v432
    %v473 = vunpack.c.l.b16 %v433
    %v474 = vunpack.c.l.b16 %v434
    %v475 = vunpack.c.l.b16 %v435
    %v476 = vpack.c.b16 %v461, %v460
    %v477 = vpack.c.b16 %v463, %v462
    %v478 = vpack.c.b16 %v465, %v464
    %v479 = vpack.c.b16 %v467, %v466
    %v480 = vpack.c.b16 %v469, %v468
    %v481 = vpack.c.b16 %v471, %v470
    %v482 = vpack.c.b16 %v473, %v472
    %v483 = vpack.c.b16 %v475, %v474
    %492 = vmatprep.subr.bf16.mxu0 0
    %493 = vmatpush1.bf16.msra.mxu0 %v476
    %494 = vmatprep.subr.bf16.mxu0 0
    %495 = vmatpush1.bf16.msra.mxu0 %v477
    %496 = vmatprep.subr.bf16.mxu0 0
    %497 = vmatpush1.bf16.msra.mxu0 %v478
    %498 = vmatprep.subr.bf16.mxu0 0
    %499 = vmatpush1.bf16.msra.mxu0 %v479
    %500 = vmatprep.subr.bf16.mxu0 0
    %501 = vmatpush1.bf16.msra.mxu0 %v480
    %502 = vmatprep.subr.bf16.mxu0 0
    %503 = vmatpush1.bf16.msra.mxu0 %v481
    %504 = vmatprep.subr.bf16.mxu0 0
    %505 = vmatpush1.bf16.msra.mxu0 %v482
    %506 = vmatprep.subr.bf16.mxu0 0
    %507 = vmatpush1.bf16.msra.mxu0 %v483
    %508 = vmatprep.subr.bf16.mxu0 0
    %509 = vmatpush1.bf16.msra.mxu0 0
    %510 = vmatprep.subr.bf16.mxu0 0
    %511 = vmatpush1.bf16.msra.mxu0 0
    %512 = vmatprep.subr.bf16.mxu0 0
    %513 = vmatpush1.bf16.msra.mxu0 0
    %514 = vmatprep.subr.bf16.mxu0 0
    %515 = vmatpush1.bf16.msra.mxu0 0
    %516 = vmatprep.subr.bf16.mxu0 0
    %517 = vmatpush1.bf16.msra.mxu0 0
    %518 = vmatprep.subr.bf16.mxu0 0
    %519 = vmatpush1.bf16.msra.mxu0 0
    %520 = vmatprep.subr.bf16.mxu0 0
    %521 = vmatpush1.bf16.msra.mxu0 0
    %522 = vmatprep.subr.bf16.mxu0 0
    %523 = vmatpush1.bf16.msra.mxu0 0
    %524 = vmatprep.mubr.bf16.mxu0 0
    %525 = vmatmul.mubr.bf16.gmra.mrb[0].mxu0 %v161
    %v526 = vpop.f32.mrb[0].mxu0
    %v527 = vadd.f32 %v442, %v526
    %v528 = vpop.f32.mrb[0].mxu0
    %v529 = vpop.f32.mrb[0].mxu0
    %v530 = vadd.f32 %v442, %v529
    %v531 = vpop.f32.mrb[0].mxu0
    %532 = vdwg.mxu0
    %s533 = scalar_lea.vmem %s7, 2
    %v534 = vld [vmem:[%s533] sm:$0x1]
    %v536 = vlaneseq
    %v537 = vshrl.u32 %v536, 7
    %v538 = vsub.s32 0, %v537
    %v539 = vrot.slane %v534, %v538
    %v541 = vmul.f32 %v287, %v539
    %v542 = vmul.f32 %v288, %v539
    %v543 = vadd.f32 %v527, %v541
    %v544 = vadd.f32 %v530, %v542
    %vm545 = vcmp.ge.f32.partialorder %v543, 0.0
    %vm546 = vcmp.ge.f32.partialorder %v544, 0.0
    %v547 = vsel %vm545, 1, 0
    %v548 = vsel %vm546, 1, 0
    %v549 = vcvt.s32.f32 %v547
    %v550 = vcvt.s32.f32 %v548
    %v551 = vsub.f32 1.0, %v417
    %v552 = vsub.f32 1.0, %v418
    %v553 = vmul.f32 %v551, %v549
    %v554 = vmul.f32 %v552, %v550
    %vm555 = vcmp.gt.f32.partialorder 0.0, 1.0
    %v556 = vsel %vm555, 1, 0
    %v557 = vcvt.s32.f32 %v556
    %v558 = vadd.f32 %v553, 0.0
    %v559 = vadd.f32 %v554, 0.0
    %v560 = vsub.f32 %v558, %v557
    %v561 = vsub.f32 %v559, %v557
    %vm562 = vcmp.gt.f32.partialorder %v560, 1.0
    %vm563 = vcmp.gt.f32.partialorder %v561, 1.0
    %v564 = vsel %vm562, 1, 0
    %v565 = vsel %vm563, 1, 0
    %v566 = vcvt.s32.f32 %v564
    %v567 = vcvt.s32.f32 %v565
    %v568 = vmul.f32 %v560, 0.99
    %v569 = vmul.f32 %v561, 0.99
    %v570 = vadd.f32 %v568, %v553
    %v571 = vadd.f32 %v569, %v554
    %v572 = vsub.f32 %v570, %v566
    %v573 = vsub.f32 %v571, %v567
    %vm574 = vcmp.gt.f32.partialorder %v572, 1.0
    %vm575 = vcmp.gt.f32.partialorder %v573, 1.0
    %v576 = vsel %vm574, 1, 0
    %v577 = vsel %vm575, 1, 0
    %v578 = vcvt.s32.f32 %v576
    %v579 = vcvt.s32.f32 %v577
    %v580 = vmul.f32 %v572, 0.99
    %v581 = vmul.f32 %v573, 0.99
    %v582 = vadd.f32 %v580, %v553
    %v583 = vadd.f32 %v581, %v554
    %v584 = vsub.f32 %v582, %v578
    %v585 = vsub.f32 %v583, %v579
    %vm586 = vcmp.gt.f32.partialorder %v584, 1.0
    %vm587 = vcmp.gt.f32.partialorder %v585, 1.0
    %v588 = vsel %vm586, 1, 0
    %v589 = vsel %vm587, 1, 0
    %v590 = vcvt.s32.f32 %v588
    %v591 = vcvt.s32.f32 %v589
    %v592 = vmul.f32 %v584, 0.99
    %v593 = vmul.f32 %v585, 0.99
    %v594 = vadd.f32 %v592, %v553
    %v595 = vadd.f32 %v593, %v554
    %v596 = vsub.f32 %v594, %v590
    %v597 = vsub.f32 %v595, %v591
    %vm598 = vcmp.gt.f32.partialorder %v596, 1.0
    %vm599 = vcmp.gt.f32.partialorder %v597, 1.0
    %v600 = vsel %vm598, 1, 0
    %v601 = vsel %vm599, 1, 0
    %v602 = vcvt.s32.f32 %v600
    %v603 = vcvt.s32.f32 %v601
    %v604 = vmul.f32 %v596, 0.99
    %v605 = vmul.f32 %v597, 0.99
    %v608 = vrot.slane %v553, 1
    %v609 = vrot.slane %v554, 1
    %v612 = vadd.f32 %v604, %v608
    %v613 = vadd.f32 %v605, %v609
    %v614 = vsub.f32 %v612, %v602
    %v615 = vsub.f32 %v613, %v603
    %vm616 = vcmp.gt.f32.partialorder %v614, 1.0
    %vm617 = vcmp.gt.f32.partialorder %v615, 1.0
    %v618 = vsel %vm616, 1, 0
    %v619 = vsel %vm617, 1, 0
    %v620 = vcvt.s32.f32 %v618
    %v621 = vcvt.s32.f32 %v619
    %v622 = vmul.f32 %v614, 0.99
    %v623 = vmul.f32 %v615, 0.99
    %v624 = vadd.f32 %v622, %v608
    %v625 = vadd.f32 %v623, %v609
    %v626 = vsub.f32 %v624, %v620
    %v627 = vsub.f32 %v625, %v621
    %vm628 = vcmp.gt.f32.partialorder %v626, 1.0
    %vm629 = vcmp.gt.f32.partialorder %v627, 1.0
    %v630 = vsel %vm628, 1, 0
    %v631 = vsel %vm629, 1, 0
    %v632 = vcvt.s32.f32 %v630
    %v633 = vcvt.s32.f32 %v631
    %v634 = vmul.f32 %v626, 0.99
    %v635 = vmul.f32 %v627, 0.99
    %v636 = vadd.f32 %v634, %v608
    %v637 = vadd.f32 %v635, %v609
    %v638 = vsub.f32 %v636, %v632
    %v639 = vsub.f32 %v637, %v633
    %vm640 = vcmp.gt.f32.partialorder %v638, 1.0
    %vm641 = vcmp.gt.f32.partialorder %v639, 1.0
    %v642 = vsel %vm640, 1, 0
    %v643 = vsel %vm641, 1, 0
    %v644 = vcvt.s32.f32 %v642
    %v645 = vcvt.s32.f32 %v643
    %v646 = vmul.f32 %v638, 0.99
    %v647 = vmul.f32 %v639, 0.99
    %v648 = vadd.f32 %v646, %v608
    %v649 = vadd.f32 %v647, %v609
    %v650 = vsub.f32 %v648, %v644
    %v651 = vsub.f32 %v649, %v645
    %vm652 = vcmp.gt.f32.partialorder %v650, 1.0
    %vm653 = vcmp.gt.f32.partialorder %v651, 1.0
    %v654 = vsel %vm652, 1, 0
    %v655 = vsel %vm653, 1, 0
    %v656 = vcvt.s32.f32 %v654
    %v657 = vcvt.s32.f32 %v655
    %v658 = vmul.f32 %v650, 0.99
    %v659 = vmul.f32 %v651, 0.99
    %v660 = vrot.slane %v553, 2
    %v661 = vrot.slane %v554, 2
    %v664 = vadd.f32 %v658, %v660
    %v665 = vadd.f32 %v659, %v661
    %v666 = vsub.f32 %v664, %v656
    %v667 = vsub.f32 %v665, %v657
    %vm668 = vcmp.gt.f32.partialorder %v666, 1.0
    %vm669 = vcmp.gt.f32.partialorder %v667, 1.0
    %v670 = vsel %vm668, 1, 0
    %v671 = vsel %vm669, 1, 0
    %v672 = vcvt.s32.f32 %v670
    %v673 = vcvt.s32.f32 %v671
    %v674 = vmul.f32 %v666, 0.99
    %v675 = vmul.f32 %v667, 0.99
    %v676 = vadd.f32 %v674, %v660
    %v677 = vadd.f32 %v675, %v661
    %v678 = vsub.f32 %v676, %v672
    %v679 = vsub.f32 %v677, %v673
    %vm680 = vcmp.gt.f32.partialorder %v678, 1.0
    %vm681 = vcmp.gt.f32.partialorder %v679, 1.0
    %v682 = vsel %vm680, 1, 0
    %v683 = vsel %vm681, 1, 0
    %v684 = vcvt.s32.f32 %v682
    %v685 = vcvt.s32.f32 %v683
    %v686 = vmul.f32 %v678, 0.99
    %v687 = vmul.f32 %v679, 0.99
    %v688 = vadd.f32 %v686, %v660
    %v689 = vadd.f32 %v687, %v661
    %v690 = vsub.f32 %v688, %v684
    %v691 = vsub.f32 %v689, %v685
    %vm692 = vcmp.gt.f32.partialorder %v690, 1.0
    %vm693 = vcmp.gt.f32.partialorder %v691, 1.0
    %v694 = vsel %vm692, 1, 0
    %v695 = vsel %vm693, 1, 0
    %v696 = vcvt.s32.f32 %v694
    %v697 = vcvt.s32.f32 %v695
    %v698 = vmul.f32 %v690, 0.99
    %v699 = vmul.f32 %v691, 0.99
    %v700 = vadd.f32 %v698, %v660
    %v701 = vadd.f32 %v699, %v661
    %v702 = vsub.f32 %v700, %v696
    %v703 = vsub.f32 %v701, %v697
    %vm704 = vcmp.gt.f32.partialorder %v702, 1.0
    %vm705 = vcmp.gt.f32.partialorder %v703, 1.0
    %v706 = vsel %vm704, 1, 0
    %v707 = vsel %vm705, 1, 0
    %v708 = vcvt.s32.f32 %v706
    %v709 = vcvt.s32.f32 %v707
    %v710 = vmul.f32 %v702, 0.99
    %v711 = vmul.f32 %v703, 0.99
    %v712 = vrot.slane %v553, 3
    %v713 = vrot.slane %v554, 3
    %v716 = vadd.f32 %v710, %v712
    %v717 = vadd.f32 %v711, %v713
    %v718 = vsub.f32 %v716, %v708
    %v719 = vsub.f32 %v717, %v709
    %vm720 = vcmp.gt.f32.partialorder %v718, 1.0
    %vm721 = vcmp.gt.f32.partialorder %v719, 1.0
    %v722 = vsel %vm720, 1, 0
    %v723 = vsel %vm721, 1, 0
    %v724 = vcvt.s32.f32 %v722
    %v725 = vcvt.s32.f32 %v723
    %v726 = vmul.f32 %v718, 0.99
    %v727 = vmul.f32 %v719, 0.99
    %v728 = vadd.f32 %v726, %v712
    %v729 = vadd.f32 %v727, %v713
    %v730 = vsub.f32 %v728, %v724
    %v731 = vsub.f32 %v729, %v725
    %vm732 = vcmp.gt.f32.partialorder %v730, 1.0
    %vm733 = vcmp.gt.f32.partialorder %v731, 1.0
    %v734 = vsel %vm732, 1, 0
    %v735 = vsel %vm733, 1, 0
    %v736 = vcvt.s32.f32 %v734
    %v737 = vcvt.s32.f32 %v735
    %v738 = vmul.f32 %v730, 0.99
    %v739 = vmul.f32 %v731, 0.99
    %v740 = vadd.f32 %v738, %v712
    %v741 = vadd.f32 %v739, %v713
    %v742 = vsub.f32 %v740, %v736
    %v743 = vsub.f32 %v741, %v737
    %vm744 = vcmp.gt.f32.partialorder %v742, 1.0
    %vm745 = vcmp.gt.f32.partialorder %v743, 1.0
    %v746 = vsel %vm744, 1, 0
    %v747 = vsel %vm745, 1, 0
    %v748 = vcvt.s32.f32 %v746
    %v749 = vcvt.s32.f32 %v747
    %v750 = vmul.f32 %v742, 0.99
    %v751 = vmul.f32 %v743, 0.99
    %v752 = vadd.f32 %v750, %v712
    %v753 = vadd.f32 %v751, %v713
    %v754 = vsub.f32 %v752, %v748
    %v755 = vsub.f32 %v753, %v749
    %vm756 = vcmp.gt.f32.partialorder %v754, 1.0
    %vm757 = vcmp.gt.f32.partialorder %v755, 1.0
    %v758 = vsel %vm756, 1, 0
    %v759 = vsel %vm757, 1, 0
    %v760 = vcvt.s32.f32 %v758
    %v761 = vcvt.s32.f32 %v759
    %v762 = vmul.f32 %v754, 0.99
    %v763 = vmul.f32 %v755, 0.99
    %v764 = vrot.slane %v553, 4
    %v765 = vrot.slane %v554, 4
    %v768 = vadd.f32 %v762, %v764
    %v769 = vadd.f32 %v763, %v765
    %v770 = vsub.f32 %v768, %v760
    %v771 = vsub.f32 %v769, %v761
    %vm772 = vcmp.gt.f32.partialorder %v770, 1.0
    %vm773 = vcmp.gt.f32.partialorder %v771, 1.0
    %v774 = vsel %vm772, 1, 0
    %v775 = vsel %vm773, 1, 0
    %v776 = vcvt.s32.f32 %v774
    %v777 = vcvt.s32.f32 %v775
    %v778 = vmul.f32 %v770, 0.99
    %v779 = vmul.f32 %v771, 0.99
    %v780 = vadd.f32 %v778, %v764
    %v781 = vadd.f32 %v779, %v765
    %v782 = vsub.f32 %v780, %v776
    %v783 = vsub.f32 %v781, %v777
    %vm784 = vcmp.gt.f32.partialorder %v782, 1.0
    %vm785 = vcmp.gt.f32.partialorder %v783, 1.0
    %v786 = vsel %vm784, 1, 0
    %v787 = vsel %vm785, 1, 0
    %v788 = vcvt.s32.f32 %v786
    %v789 = vcvt.s32.f32 %v787
    %v790 = vmul.f32 %v782, 0.99
    %v791 = vmul.f32 %v783, 0.99
    %v792 = vadd.f32 %v790, %v764
    %v793 = vadd.f32 %v791, %v765
    %v794 = vsub.f32 %v792, %v788
    %v795 = vsub.f32 %v793, %v789
    %vm796 = vcmp.gt.f32.partialorder %v794, 1.0
    %vm797 = vcmp.gt.f32.partialorder %v795, 1.0
    %v798 = vsel %vm796, 1, 0
    %v799 = vsel %vm797, 1, 0
    %v800 = vcvt.s32.f32 %v798
    %v801 = vcvt.s32.f32 %v799
    %v802 = vmul.f32 %v794, 0.99
    %v803 = vmul.f32 %v795, 0.99
    %v804 = vadd.f32 %v802, %v764
    %v805 = vadd.f32 %v803, %v765
    %v806 = vsub.f32 %v804, %v800
    %v807 = vsub.f32 %v805, %v801
    %vm808 = vcmp.gt.f32.partialorder %v806, 1.0
    %vm809 = vcmp.gt.f32.partialorder %v807, 1.0
    %v810 = vsel %vm808, 1, 0
    %v811 = vsel %vm809, 1, 0
    %v812 = vcvt.s32.f32 %v810
    %v813 = vcvt.s32.f32 %v811
    %v814 = vmul.f32 %v806, 0.99
    %v815 = vmul.f32 %v807, 0.99
    %v816 = vrot.slane %v553, 5
    %v817 = vrot.slane %v554, 5
    %v820 = vadd.f32 %v814, %v816
    %v821 = vadd.f32 %v815, %v817
    %v822 = vsub.f32 %v820, %v812
    %v823 = vsub.f32 %v821, %v813
    %vm824 = vcmp.gt.f32.partialorder %v822, 1.0
    %vm825 = vcmp.gt.f32.partialorder %v823, 1.0
    %v826 = vsel %vm824, 1, 0
    %v827 = vsel %vm825, 1, 0
    %v828 = vcvt.s32.f32 %v826
    %v829 = vcvt.s32.f32 %v827
    %v830 = vmul.f32 %v822, 0.99
    %v831 = vmul.f32 %v823, 0.99
    %v832 = vadd.f32 %v830, %v816
    %v833 = vadd.f32 %v831, %v817
    %v834 = vsub.f32 %v832, %v828
    %v835 = vsub.f32 %v833, %v829
    %vm836 = vcmp.gt.f32.partialorder %v834, 1.0
    %vm837 = vcmp.gt.f32.partialorder %v835, 1.0
    %v838 = vsel %vm836, 1, 0
    %v839 = vsel %vm837, 1, 0
    %v840 = vcvt.s32.f32 %v838
    %v841 = vcvt.s32.f32 %v839
    %v842 = vmul.f32 %v834, 0.99
    %v843 = vmul.f32 %v835, 0.99
    %v844 = vadd.f32 %v842, %v816
    %v845 = vadd.f32 %v843, %v817
    %v846 = vsub.f32 %v844, %v840
    %v847 = vsub.f32 %v845, %v841
    %vm848 = vcmp.gt.f32.partialorder %v846, 1.0
    %vm849 = vcmp.gt.f32.partialorder %v847, 1.0
    %v850 = vsel %vm848, 1, 0
    %v851 = vsel %vm849, 1, 0
    %v852 = vcvt.s32.f32 %v850
    %v853 = vcvt.s32.f32 %v851
    %v854 = vmul.f32 %v846, 0.99
    %v855 = vmul.f32 %v847, 0.99
    %v856 = vadd.f32 %v854, %v816
    %v857 = vadd.f32 %v855, %v817
    %v858 = vsub.f32 %v856, %v852
    %v859 = vsub.f32 %v857, %v853
    %vm860 = vcmp.gt.f32.partialorder %v858, 1.0
    %vm861 = vcmp.gt.f32.partialorder %v859, 1.0
    %v862 = vsel %vm860, 1, 0
    %v863 = vsel %vm861, 1, 0
    %v864 = vcvt.s32.f32 %v862
    %v865 = vcvt.s32.f32 %v863
    %v866 = vmul.f32 %v858, 0.99
    %v867 = vmul.f32 %v859, 0.99
    %v868 = vrot.slane %v553, 6
    %v869 = vrot.slane %v554, 6
    %v872 = vadd.f32 %v866, %v868
    %v873 = vadd.f32 %v867, %v869
    %v874 = vsub.f32 %v872, %v864
    %v875 = vsub.f32 %v873, %v865
    %vm876 = vcmp.gt.f32.partialorder %v874, 1.0
    %vm877 = vcmp.gt.f32.partialorder %v875, 1.0
    %v878 = vsel %vm876, 1, 0
    %v879 = vsel %vm877, 1, 0
    %v880 = vcvt.s32.f32 %v878
    %v881 = vcvt.s32.f32 %v879
    %v882 = vmul.f32 %v874, 0.99
    %v883 = vmul.f32 %v875, 0.99
    %v884 = vadd.f32 %v882, %v868
    %v885 = vadd.f32 %v883, %v869
    %v886 = vsub.f32 %v884, %v880
    %v887 = vsub.f32 %v885, %v881
    %vm888 = vcmp.gt.f32.partialorder %v886, 1.0
    %vm889 = vcmp.gt.f32.partialorder %v887, 1.0
    %v890 = vsel %vm888, 1, 0
    %v891 = vsel %vm889, 1, 0
    %v892 = vcvt.s32.f32 %v890
    %v893 = vcvt.s32.f32 %v891
    %v894 = vmul.f32 %v886, 0.99
    %v895 = vmul.f32 %v887, 0.99
    %v896 = vadd.f32 %v894, %v868
    %v897 = vadd.f32 %v895, %v869
    %v898 = vsub.f32 %v896, %v892
    %v899 = vsub.f32 %v897, %v893
    %vm900 = vcmp.gt.f32.partialorder %v898, 1.0
    %vm901 = vcmp.gt.f32.partialorder %v899, 1.0
    %v902 = vsel %vm900, 1, 0
    %v903 = vsel %vm901, 1, 0
    %v904 = vcvt.s32.f32 %v902
    %v905 = vcvt.s32.f32 %v903
    %v906 = vmul.f32 %v898, 0.99
    %v907 = vmul.f32 %v899, 0.99
    %v908 = vadd.f32 %v906, %v868
    %v909 = vadd.f32 %v907, %v869
    %v910 = vsub.f32 %v908, %v904
    %v911 = vsub.f32 %v909, %v905
    %vm912 = vcmp.gt.f32.partialorder %v910, 1.0
    %vm913 = vcmp.gt.f32.partialorder %v911, 1.0
    %v914 = vsel %vm912, 1, 0
    %v915 = vsel %vm913, 1, 0
    %v916 = vcvt.s32.f32 %v914
    %v917 = vcvt.s32.f32 %v915
    %v918 = vmul.f32 %v910, 0.99
    %v919 = vmul.f32 %v911, 0.99
    %v920 = vrot.slane %v553, 7
    %v921 = vrot.slane %v554, 7
    %v924 = vadd.f32 %v918, %v920
    %v925 = vadd.f32 %v919, %v921
    %v926 = vsub.f32 %v924, %v916
    %v927 = vsub.f32 %v925, %v917
    %vm928 = vcmp.gt.f32.partialorder %v926, 1.0
    %vm929 = vcmp.gt.f32.partialorder %v927, 1.0
    %v930 = vsel %vm928, 1, 0
    %v931 = vsel %vm929, 1, 0
    %v932 = vcvt.s32.f32 %v930
    %v933 = vcvt.s32.f32 %v931
    %v934 = vmul.f32 %v926, 0.99
    %v935 = vmul.f32 %v927, 0.99
    %v936 = vadd.f32 %v934, %v920
    %v937 = vadd.f32 %v935, %v921
    %v938 = vsub.f32 %v936, %v932
    %v939 = vsub.f32 %v937, %v933
    %vm940 = vcmp.gt.f32.partialorder %v938, 1.0
    %vm941 = vcmp.gt.f32.partialorder %v939, 1.0
    %v942 = vsel %vm940, 1, 0
    %v943 = vsel %vm941, 1, 0
    %v944 = vcvt.s32.f32 %v942
    %v945 = vcvt.s32.f32 %v943
    %v946 = vmul.f32 %v938, 0.99
    %v947 = vmul.f32 %v939, 0.99
    %v948 = vadd.f32 %v946, %v920
    %v949 = vadd.f32 %v947, %v921
    %v950 = vsub.f32 %v948, %v944
    %v951 = vsub.f32 %v949, %v945
    %vm952 = vcmp.gt.f32.partialorder %v950, 1.0
    %vm953 = vcmp.gt.f32.partialorder %v951, 1.0
    %v954 = vsel %vm952, 1, 0
    %v955 = vsel %vm953, 1, 0
    %v956 = vcvt.s32.f32 %v954
    %v957 = vcvt.s32.f32 %v955
    %v958 = vmul.f32 %v950, 0.99
    %v959 = vmul.f32 %v951, 0.99
    %v960 = vadd.f32 %v958, %v920
    %v961 = vadd.f32 %v959, %v921
    %v962 = vsub.f32 %v960, %v956
    %v963 = vsub.f32 %v961, %v957
    %vm964 = vcmp.gt.f32.partialorder %v962, 1.0
    %vm965 = vcmp.gt.f32.partialorder %v963, 1.0
    %v966 = vsel %vm964, 1, 0
    %v967 = vsel %vm965, 1, 0
    %v968 = vcvt.s32.f32 %v966
    %v969 = vcvt.s32.f32 %v967
    %970 = vst [vmem:[%s8] sm:$0x1] %v932
    %971 = vst [vmem:[%s8 + $0x1] sm:$0x1] %v933
    %972 = vst [vmem:[%s8 + $0x2] sm:$0x1] %v944
    %973 = vst [vmem:[%s8 + $0x3] sm:$0x1] %v945
    %974 = vst [vmem:[%s8 + $0x4] sm:$0x1] %v956
    %975 = vst [vmem:[%s8 + $0x5] sm:$0x1] %v957
    %976 = vst [vmem:[%s8 + $0x6] sm:$0x1] %v968
    %977 = vst [vmem:[%s8 + $0x7] sm:$0x1] %v969
    // Predicated region
    $region38: #{_lambda_.1} parent=1 // pred_check
      _
    $region39: #{_lambda_.1} parent=1 // pred_check_branch
      %979 = sbr.rel (0) target = $region41
    $region40: #{_lambda_.1} parent=1 // pred_region
      _
    $region41: #{_lambda_.1} parent=1 // pred_fallthru
      _
    // Predicated region
    $region42: #{_lambda_.1} parent=1 // pred_check
      _
    $region43: #{_lambda_.1} parent=1 // pred_check_branch
      %981 = sbr.rel (0) target = $region45
    $region44: #{_lambda_.1} parent=1 // pred_region
      _
    $region45: #{_lambda_.1} parent=1 // pred_fallthru
      _
    %982 = vsyncpa [#allocation3], 1

</llo_original>
